<compile_context>
chip_gen: v5e
topology: v5e:2x2
jax: 0.10.0
libtpu: 0.0.40
codegen_flags: <defaults>
</compile_context>

<pallas_src>
import functools

import jax
import jax.numpy as jnp
from jax.experimental import pallas as pl
from jax.experimental.pallas import tpu as pltpu


# ----------------------------------------------------------------------------
# Pallas kernel: grid = (batch, layer).  One batch element per parallel step,
# layers iterated sequentially with the activation resident in VMEM scratch.
# ----------------------------------------------------------------------------
def encoder_kernel(src_ref, pos_ref,
                   wqk_ref, bqk_ref, wv_ref, bv_ref, wo_ref, bo_ref,
                   ln1w_ref, ln1b_ref, w1_ref, b1_ref, w2_ref, b2_ref,
                   ln2w_ref, ln2b_ref,
                   out_ref, x_ref, *, nhead):
    l = pl.program_id(1)
    S, D = x_ref.shape
    H = nhead
    hd = D // H
    scale = 1.0 / float(hd) ** 0.5
    cd = wqk_ref.dtype          # matmul compute dtype (f32 or bf16)

    # Load the activation for this batch element into the resident scratch at
    # the first layer; later layers read the previous layer's output from VMEM.
    @pl.when(l == 0)
    def _():
        x_ref[...] = src_ref[...].astype(jnp.float32)

    x = x_ref[...]                                        # (S, D), f32

    def mm(act, w_ref, b_ref):
        # Weights are pre-transposed to (in, out) in the wrapper: no `.T` here.
        return jnp.dot(act.astype(cd), w_ref[...],
                       preferred_element_type=jnp.float32) + b_ref[...]

    # ---- self-attention -----------------------------------------------------
    qk_in = x + pos_ref[...].astype(jnp.float32)          # q = k = src + pos
    qk = mm(qk_in, wqk_ref, bqk_ref)                      # (S, 2D)  fused Q/K
    v = mm(x, wv_ref, bv_ref)                             # (S, D)

    q = (qk[:, :D] * scale).reshape(S, H, hd)
    k = qk[:, D:].reshape(S, H, hd)
    vh = v.reshape(S, H, hd)

    # Head-batched attention: two batched MXU contractions, no per-head loop.
    s = jnp.einsum("qhd,khd->hqk", q.astype(cd), k.astype(cd),
                   preferred_element_type=jnp.float32)    # (H, S, S)
    s = s - jnp.max(s, axis=-1, keepdims=True)
    e = jnp.exp(s)
    denom = jnp.sum(e, axis=-1, keepdims=True)
    a = e * pl.reciprocal(denom, approx=True)             # divide on the EUP
    o = jnp.einsum("hqk,khd->qhd", a.astype(cd), vh.astype(cd),
                   preferred_element_type=jnp.float32)    # (S, H, hd)
    attn = mm(o.reshape(S, D), wo_ref, bo_ref)            # (S, D)

    def layernorm(z, w, b, eps=1e-5):
        mu = jnp.mean(z, axis=-1, keepdims=True)
        var = jnp.mean(jnp.square(z - mu), axis=-1, keepdims=True)
        return (z - mu) * jax.lax.rsqrt(var + eps) * w + b

    # ---- residual + norm1, FFN, residual + norm2 ---------------------------
    y = layernorm(x + attn, ln1w_ref[...], ln1b_ref[...])
    ff = jnp.maximum(mm(y, w1_ref, b1_ref), 0.0)
    ff = mm(ff, w2_ref, b2_ref)
    x_new = layernorm(y + ff, ln2w_ref[...], ln2b_ref[...])

    x_ref[...] = x_new                                    # stays resident in VMEM

    @pl.when(l == pl.num_programs(1) - 1)
    def _():
        out_ref[...] = x_new.astype(out_ref.dtype)


# ----------------------------------------------------------------------------
# Wrapper: pack / pre-transpose weights once, stack over layers, single call.
# ----------------------------------------------------------------------------
_PACKED_KEYS = ["w_qk", "b_qk", "w_v", "b_v", "w_o", "b_o",
                "ln1w", "ln1b", "w_1", "b_1", "w_2", "b_2", "ln2w", "ln2b"]
_MATMUL_KEYS = {"w_qk", "w_v", "w_o", "w_1", "w_2"}


def pack_params(layer_params, compute_dtype):
    """PyTorch-convention per-layer dicts -> stacked, (in,out)-transposed arrays."""
    per_layer = []
    for prm in layer_params:
        per_layer.append({
            "w_qk": jnp.concatenate([prm["wq"].T, prm["wk"].T], axis=1),  # (D, 2D)
            "b_qk": jnp.concatenate([prm["bq"], prm["bk"]], axis=1),      # (1, 2D)
            "w_v": prm["wv"].T, "b_v": prm["bv"],
            "w_o": prm["wo"].T, "b_o": prm["bo"],
            "ln1w": prm["ln1w"], "ln1b": prm["ln1b"],
            "w_1": prm["w1"].T, "b_1": prm["b1"],
            "w_2": prm["w2"].T, "b_2": prm["b2"],
            "ln2w": prm["ln2w"], "ln2b": prm["ln2b"],
        })
    stacked = {k: jnp.stack([p[k] for p in per_layer], axis=0) for k in _PACKED_KEYS}
    for k in _MATMUL_KEYS:
        stacked[k] = stacked[k].astype(compute_dtype)     # bf16 halves weight DMA
    return [stacked[k] for k in _PACKED_KEYS]


def transformer_encoder(src_sbd, pos_sbd, layer_params, nhead,
                        compute_dtype=jnp.float32, vmem_limit_bytes=None):
    """src_sbd, pos_sbd: (S, B, D) seq-first (PyTorch convention)."""
    S, B, D = src_sbd.shape
    L = len(layer_params)
    x = jnp.transpose(src_sbd, (1, 0, 2))                 # (B, S, D)
    p = jnp.transpose(pos_sbd, (1, 0, 2))
    weights = pack_params(layer_params, compute_dtype)

    act_spec = pl.BlockSpec((None, S, D), lambda b, l: (b, 0, 0))

    def w_spec(arr):
        nz = arr.ndim - 1
        return pl.BlockSpec((None,) + tuple(arr.shape[1:]),
                            lambda b, l, _n=nz: (l,) + (0,) * _n)

    in_specs = [act_spec, act_spec] + [w_spec(w) for w in weights]

    out = pl.pallas_call(
        functools.partial(encoder_kernel, nhead=nhead),
        out_shape=jax.ShapeDtypeStruct((B, S, D), jnp.float32),
        grid=(B, L),
        in_specs=in_specs,
        out_specs=pl.BlockSpec((None, S, D), lambda b, l: (b, 0, 0)),
        scratch_shapes=[pltpu.VMEM((S, D), jnp.float32)],  # layer-resident activation
        compiler_params=pltpu.CompilerParams(
            dimension_semantics=("parallel", "arbitrary"),
            vmem_limit_bytes=vmem_limit_bytes),
    )(x, p, *weights)

    # TODO(synk): optional final `norm` is None in the default constructor; not applied.
    # TODO(synk): at real DETR sizes (D=256) the last dim is lane-dense; at this toy
    # D=32 we accept masked stores rather than zero-padding D (LayerNorm masking).
    return jnp.transpose(out, (1, 0, 2))                  # back to (S, B, D)


# ----------------------------------------------------------------------------
# Pure-JAX reference (mirrors PyTorch semantics) for correctness checks.
# ----------------------------------------------------------------------------
def _ref_layer(x, p, prm, nhead):
    D = x.shape[-1]
    hd = D // nhead
    qk_in = x + p
    q = qk_in @ prm["wq"].T + prm["bq"]
    k = qk_in @ prm["wk"].T + prm["bk"]
    v = x @ prm["wv"].T + prm["bv"]

    def split(t):  # (B, S, D) -> (B, H, S, hd)
        B, S, _ = t.shape
        return t.reshape(B, S, nhead, hd).transpose(0, 2, 1, 3)

    qh, kh, vh = split(q) / (hd ** 0.5), split(k), split(v)
    s = jnp.einsum("bhqd,bhkd->bhqk", qh, kh)
    a = jax.nn.softmax(s, axis=-1)
    o = jnp.einsum("bhqk,bhkd->bhqd", a, vh)
    o = o.transpose(0, 2, 1, 3).reshape(x.shape)
    attn = o @ prm["wo"].T + prm["bo"]

    def ln(z, w, b, eps=1e-5):
        mu = z.mean(-1, keepdims=True)
        var = ((z - mu) ** 2).mean(-1, keepdims=True)
        return (z - mu) / jnp.sqrt(var + eps) * w + b

    y = ln(x + attn, prm["ln1w"], prm["ln1b"])
    ff = jnp.maximum(y @ prm["w1"].T + prm["b1"], 0.0) @ prm["w2"].T + prm["b2"]
    return ln(y + ff, prm["ln2w"], prm["ln2b"])


def _ref_encoder(src_sbd, pos_sbd, layer_params, nhead):
    x = jnp.transpose(src_sbd, (1, 0, 2))
    p = jnp.transpose(pos_sbd, (1, 0, 2))
    for prm in layer_params:
        x = _ref_layer(x, p, prm, nhead)
    return jnp.transpose(x, (1, 0, 2))


# ----------------------------------------------------------------------------
# Deterministic parameter init (PyTorch Linear / MHA / LayerNorm shapes).
# ----------------------------------------------------------------------------
def init_layer_params(key, d_model, dim_ff):
    ks = jax.random.split(key, 8)
    f32 = jnp.float32
    s = 0.05
    return {
        "wq": jax.random.normal(ks[0], (d_model, d_model), f32) * s,
        "bq": jnp.zeros((1, d_model), f32),
        "wk": jax.random.normal(ks[1], (d_model, d_model), f32) * s,
        "bk": jnp.zeros((1, d_model), f32),
        "wv": jax.random.normal(ks[2], (d_model, d_model), f32) * s,
        "bv": jnp.zeros((1, d_model), f32),
        "wo": jax.random.normal(ks[3], (d_model, d_model), f32) * s,
        "bo": jax.random.normal(ks[4], (1, d_model), f32) * s,
        "ln1w": jnp.ones((1, d_model), f32),
        "ln1b": jnp.zeros((1, d_model), f32),
        "w1": jax.random.normal(ks[5], (dim_ff, d_model), f32) * s,
        "b1": jax.random.normal(ks[6], (1, dim_ff), f32) * s,
        "w2": jax.random.normal(ks[7], (d_model, dim_ff), f32) * s,
        "b2": jnp.zeros((1, d_model), f32),
        "ln2w": jnp.ones((1, d_model), f32),
        "ln2b": jnp.zeros((1, d_model), f32),
    }


if __name__ == "__main__":
    # Small shapes consistent with the module's forward (seq-first inputs).
    S, B, D = 16, 2, 32            # seq len, batch, d_model
    NHEAD, DIM_FF, NUM_LAYERS = 4, 64, 2

    root = jax.random.PRNGKey(0)
    k_src, k_pos, k_par = jax.random.split(root, 3)
    src = jax.random.normal(k_src, (S, B, D), jnp.float32)   # (S, B, D)
    pos = jax.random.normal(k_pos, (S, B, D), jnp.float32)

    layer_keys = jax.random.split(k_par, NUM_LAYERS)
    layer_params = [init_layer_params(k, D, DIM_FF) for k in layer_keys]

    ref = jax.block_until_ready(_ref_encoder(src, pos, layer_params, NHEAD))

    # f32 matmul path.
    out = jax.block_until_ready(
        transformer_encoder(src, pos, layer_params, NHEAD,
                            compute_dtype=jnp.float32))
    assert out.shape == (S, B, D)
    assert jnp.allclose(out, ref, rtol=1e-2, atol=1e-2), \
        "f32 kernel mismatch vs JAX reference"

    # bf16 matmul path (v6e/v7x MXU rate, half the weight DMA), f32 accumulation.
    out_bf16 = jax.block_until_ready(
        transformer_encoder(src, pos, layer_params, NHEAD,
                            compute_dtype=jnp.bfloat16))
    assert jnp.allclose(out_bf16, ref, rtol=1e-1, atol=1e-1), \
        "bf16 kernel mismatch vs JAX reference"

    print("KERNEL_OK")
</pallas_src>

<mosaic_0001>
module attributes {stable_mosaic.version = 11 : i64} {
  func.func @encoder_kernel(%arg0: i32, %arg1: i32, %arg2: memref<1x16x32xf32, #tpu.memory_space<vmem>>, %arg3: memref<1x16x32xf32, #tpu.memory_space<vmem>>, %arg4: memref<1x32x64xf32, #tpu.memory_space<vmem>>, %arg5: memref<1x1x64xf32, #tpu.memory_space<vmem>>, %arg6: memref<1x32x32xf32, #tpu.memory_space<vmem>>, %arg7: memref<1x1x32xf32, #tpu.memory_space<vmem>>, %arg8: memref<1x32x32xf32, #tpu.memory_space<vmem>>, %arg9: memref<1x1x32xf32, #tpu.memory_space<vmem>>, %arg10: memref<1x1x32xf32, #tpu.memory_space<vmem>>, %arg11: memref<1x1x32xf32, #tpu.memory_space<vmem>>, %arg12: memref<1x32x64xf32, #tpu.memory_space<vmem>>, %arg13: memref<1x1x64xf32, #tpu.memory_space<vmem>>, %arg14: memref<1x64x32xf32, #tpu.memory_space<vmem>>, %arg15: memref<1x1x32xf32, #tpu.memory_space<vmem>>, %arg16: memref<1x1x32xf32, #tpu.memory_space<vmem>>, %arg17: memref<1x1x32xf32, #tpu.memory_space<vmem>>, %arg18: memref<1x16x32xf32, #tpu.memory_space<vmem>>, %arg19: memref<16x32xf32, #tpu.memory_space<vmem>>) attributes {dimension_semantics = [#tpu.dimension_semantics<parallel>, #tpu.dimension_semantics<arbitrary>], iteration_bounds = array<i64: 2, 2>, scalar_prefetch = 0 : i64, scratch_operands = 1 : i64, tpu.core_type = #tpu.core_type<tc>, window_params = [{transform_indices = @transform_0, window_bounds = array<i64: 1, 16, 32>}, {transform_indices = @transform_1, window_bounds = array<i64: 1, 16, 32>}, {transform_indices = @transform_2, window_bounds = array<i64: 1, 32, 64>}, {transform_indices = @transform_3, window_bounds = array<i64: 1, 1, 64>}, {transform_indices = @transform_4, window_bounds = array<i64: 1, 32, 32>}, {transform_indices = @transform_5, window_bounds = array<i64: 1, 1, 32>}, {transform_indices = @transform_6, window_bounds = array<i64: 1, 32, 32>}, {transform_indices = @transform_7, window_bounds = array<i64: 1, 1, 32>}, {transform_indices = @transform_8, window_bounds = array<i64: 1, 1, 32>}, {transform_indices = @transform_9, window_bounds = array<i64: 1, 1, 32>}, {transform_indices = @transform_10, window_bounds = array<i64: 1, 32, 64>}, {transform_indices = @transform_11, window_bounds = array<i64: 1, 1, 64>}, {transform_indices = @transform_12, window_bounds = array<i64: 1, 64, 32>}, {transform_indices = @transform_13, window_bounds = array<i64: 1, 1, 32>}, {transform_indices = @transform_14, window_bounds = array<i64: 1, 1, 32>}, {transform_indices = @transform_15, window_bounds = array<i64: 1, 1, 32>}, {transform_indices = @transform_16, window_bounds = array<i64: 1, 16, 32>}]} {
    %c0_i32 = arith.constant 0 : i32
    %0 = arith.cmpi eq, %arg1, %c0_i32 : i32
    %1 = arith.extui %0 : i1 to i32
    %c0_i32_0 = arith.constant 0 : i32
    %2 = arith.cmpi ne, %1, %c0_i32_0 : i32
    scf.if %2 {
      %c0_70 = arith.constant 0 : index
      %c0_71 = arith.constant 0 : index
      %c0_72 = arith.constant 0 : index
      %123 = vector.load %arg2[%c0_70, %c0_71, %c0_72] : memref<1x16x32xf32, #tpu.memory_space<vmem>>, vector<1x16x32xf32>
      %124 = vector.shape_cast %123 : vector<1x16x32xf32> to vector<16x32xf32>
      %c0_73 = arith.constant 0 : index
      %c0_74 = arith.constant 0 : index
      %125 = vector.load %arg19[%c0_73, %c0_74] : memref<16x32xf32, #tpu.memory_space<vmem>>, vector<16x32xf32>
      tpu.vector_store %arg19[%c0_73, %c0_74], %124 {strides = array<i32>} : memref<16x32xf32, #tpu.memory_space<vmem>>, vector<16x32xf32>,
    } else {
    }
    %c0 = arith.constant 0 : index
    %c0_1 = arith.constant 0 : index
    %3 = vector.load %arg19[%c0, %c0_1] : memref<16x32xf32, #tpu.memory_space<vmem>>, vector<16x32xf32>
    %c0_2 = arith.constant 0 : index
    %c0_3 = arith.constant 0 : index
    %c0_4 = arith.constant 0 : index
    %4 = vector.load %arg3[%c0_2, %c0_3, %c0_4] : memref<1x16x32xf32, #tpu.memory_space<vmem>>, vector<1x16x32xf32>
    %5 = vector.shape_cast %4 : vector<1x16x32xf32> to vector<16x32xf32>
    %6 = arith.addf %3, %5 : vector<16x32xf32>
    %c0_5 = arith.constant 0 : index
    %c0_6 = arith.constant 0 : index
    %c0_7 = arith.constant 0 : index
    %7 = vector.load %arg4[%c0_5, %c0_6, %c0_7] : memref<1x32x64xf32, #tpu.memory_space<vmem>>, vector<1x32x64xf32>
    %8 = vector.shape_cast %7 : vector<1x32x64xf32> to vector<32x64xf32>
    %cst = arith.constant dense<0.000000e+00> : vector<16x64xf32>
    %9 = tpu.matmul %6, %8, %cst {dimension_numbers = #tpu.dot_dimension_numbers<[1], [0], [0], [1], [0, 0, 1, 1], [], []>} : vector<16x32xf32>, vector<32x64xf32>, vector<16x64xf32> -> vector<16x64xf32>
    %c0_8 = arith.constant 0 : index
    %c0_9 = arith.constant 0 : index
    %c0_10 = arith.constant 0 : index
    %10 = vector.load %arg5[%c0_8, %c0_9, %c0_10] : memref<1x1x64xf32, #tpu.memory_space<vmem>>, vector<1x1x64xf32>
    %11 = vector.shape_cast %10 : vector<1x1x64xf32> to vector<1x64xf32>
    %12 = vector.broadcast %11 : vector<1x64xf32> to vector<16x64xf32>
    %13 = arith.addf %9, %12 : vector<16x64xf32>
    %c0_11 = arith.constant 0 : index
    %c0_12 = arith.constant 0 : index
    %c0_13 = arith.constant 0 : index
    %14 = vector.load %arg6[%c0_11, %c0_12, %c0_13] : memref<1x32x32xf32, #tpu.memory_space<vmem>>, vector<1x32x32xf32>
    %15 = vector.shape_cast %14 : vector<1x32x32xf32> to vector<32x32xf32>
    %cst_14 = arith.constant dense<0.000000e+00> : vector<16x32xf32>
    %16 = tpu.matmul %3, %15, %cst_14 {dimension_numbers = #tpu.dot_dimension_numbers<[1], [0], [0], [1], [0, 0, 1, 1], [], []>} : vector<16x32xf32>, vector<32x32xf32>, vector<16x32xf32> -> vector<16x32xf32>
    %c0_15 = arith.constant 0 : index
    %c0_16 = arith.constant 0 : index
    %c0_17 = arith.constant 0 : index
    %17 = vector.load %arg7[%c0_15, %c0_16, %c0_17] : memref<1x1x32xf32, #tpu.memory_space<vmem>>, vector<1x1x32xf32>
    %18 = vector.shape_cast %17 : vector<1x1x32xf32> to vector<1x32xf32>
    %19 = vector.broadcast %18 : vector<1x32xf32> to vector<16x32xf32>
    %20 = arith.addf %16, %19 : vector<16x32xf32>
    %21 = vector.extract_strided_slice %13 {offsets = [0, 0], sizes = [16, 32], strides = [1, 1]} : vector<16x64xf32> to vector<16x32xf32>
    %cst_18 = arith.constant 0.353553385 : f32
    %22 = vector.broadcast %cst_18 : f32 to vector<16x32xf32>
    %23 = arith.mulf %21, %22 : vector<16x32xf32>
    %24 = vector.shape_cast %23 : vector<16x32xf32> to vector<16x4x8xf32>
    %25 = vector.extract_strided_slice %13 {offsets = [0, 32], sizes = [16, 32], strides = [1, 1]} : vector<16x64xf32> to vector<16x32xf32>
    %26 = vector.shape_cast %25 : vector<16x32xf32> to vector<16x4x8xf32>
    %27 = vector.shape_cast %20 : vector<16x32xf32> to vector<16x4x8xf32>
    "tpu.trace_start"() <{level = 10 : i32, message = "qhd,khd->hqk"}> : () -> ()
    %cst_19 = arith.constant dense<0.000000e+00> : vector<4x16x16xf32>
    %28 = tpu.matmul %24, %26, %cst_19 {dimension_numbers = #tpu.dot_dimension_numbers<[2], [2], [0], [0], [0, 1, 0, 0, 1, 0], [1], [1]>} : vector<16x4x8xf32>, vector<16x4x8xf32>, vector<4x16x16xf32> -> vector<4x16x16xf32>
    "tpu.trace_stop"() : () -> ()
    %cst_20 = arith.constant dense<0xFF800000> : vector<4x16xf32>
    %29 = vector.multi_reduction <maximumf>, %28, %cst_20 [2] : vector<4x16x16xf32> to vector<4x16xf32>
    %30 = vector.shape_cast %29 : vector<4x16xf32> to vector<4x16x1xf32>
    %31 = vector.broadcast %30 : vector<4x16x1xf32> to vector<4x16x16xf32>
    %32 = arith.subf %28, %31 : vector<4x16x16xf32>
    %33 = math.exp %32 : vector<4x16x16xf32>
    %cst_21 = arith.constant dense<0.000000e+00> : vector<4x16xf32>
    %34 = vector.multi_reduction <add>, %33, %cst_21 [2] : vector<4x16x16xf32> to vector<4x16xf32>
    %35 = vector.shape_cast %34 : vector<4x16xf32> to vector<4x16x1xf32>
    %36 = tpu.reciprocal %35 {approx = true} : vector<4x16x1xf32> -> vector<4x16x1xf32>
    %37 = vector.broadcast %36 : vector<4x16x1xf32> to vector<4x16x16xf32>
    %38 = arith.mulf %33, %37 : vector<4x16x16xf32>
    "tpu.trace_start"() <{level = 10 : i32, message = "hqk,khd->qhd"}> : () -> ()
    %cst_22 = arith.constant dense<0.000000e+00> : vector<4x8x16xf32>
    %39 = tpu.matmul %27, %38, %cst_22 {dimension_numbers = #tpu.dot_dimension_numbers<[0], [2], [2], [1], [0, 1, 0, 2, 1, 1], [1], [0]>} : vector<16x4x8xf32>, vector<4x16x16xf32>, vector<4x8x16xf32> -> vector<4x8x16xf32>
    %40 = tpu.transpose %39, [2, 0, 1] : vector<4x8x16xf32> -> vector<16x4x8xf32>
    "tpu.trace_stop"() : () -> ()
    %41 = vector.shape_cast %40 : vector<16x4x8xf32> to vector<16x32xf32>
    %c0_23 = arith.constant 0 : index
    %c0_24 = arith.constant 0 : index
    %c0_25 = arith.constant 0 : index
    %42 = vector.load %arg8[%c0_23, %c0_24, %c0_25] : memref<1x32x32xf32, #tpu.memory_space<vmem>>, vector<1x32x32xf32>
    %43 = vector.shape_cast %42 : vector<1x32x32xf32> to vector<32x32xf32>
    %cst_26 = arith.constant dense<0.000000e+00> : vector<16x32xf32>
    %44 = tpu.matmul %41, %43, %cst_26 {dimension_numbers = #tpu.dot_dimension_numbers<[1], [0], [0], [1], [0, 0, 1, 1], [], []>} : vector<16x32xf32>, vector<32x32xf32>, vector<16x32xf32> -> vector<16x32xf32>
    %c0_27 = arith.constant 0 : index
    %c0_28 = arith.constant 0 : index
    %c0_29 = arith.constant 0 : index
    %45 = vector.load %arg9[%c0_27, %c0_28, %c0_29] : memref<1x1x32xf32, #tpu.memory_space<vmem>>, vector<1x1x32xf32>
    %46 = vector.shape_cast %45 : vector<1x1x32xf32> to vector<1x32xf32>
    %47 = vector.broadcast %46 : vector<1x32xf32> to vector<16x32xf32>
    %48 = arith.addf %44, %47 : vector<16x32xf32>
    %49 = arith.addf %3, %48 : vector<16x32xf32>
    %c0_30 = arith.constant 0 : index
    %c0_31 = arith.constant 0 : index
    %c0_32 = arith.constant 0 : index
    %50 = vector.load %arg10[%c0_30, %c0_31, %c0_32] : memref<1x1x32xf32, #tpu.memory_space<vmem>>, vector<1x1x32xf32>
    %51 = vector.shape_cast %50 : vector<1x1x32xf32> to vector<1x32xf32>
    %c0_33 = arith.constant 0 : index
    %c0_34 = arith.constant 0 : index
    %c0_35 = arith.constant 0 : index
    %52 = vector.load %arg11[%c0_33, %c0_34, %c0_35] : memref<1x1x32xf32, #tpu.memory_space<vmem>>, vector<1x1x32xf32>
    %53 = vector.shape_cast %52 : vector<1x1x32xf32> to vector<1x32xf32>
    %cst_36 = arith.constant dense<0.000000e+00> : vector<16xf32>
    %54 = vector.multi_reduction <add>, %49, %cst_36 [1] : vector<16x32xf32> to vector<16xf32>
    %55 = vector.shape_cast %54 : vector<16xf32> to vector<16x1xf32>
    %cst_37 = arith.constant 3.200000e+01 : f32
    %56 = vector.broadcast %cst_37 : f32 to vector<16x1xf32>
    %57 = arith.divf %55, %56 : vector<16x1xf32>
    %58 = vector.broadcast %57 : vector<16x1xf32> to vector<16x32xf32>
    %59 = arith.subf %49, %58 : vector<16x32xf32>
    %60 = arith.mulf %59, %59 : vector<16x32xf32>
    %cst_38 = arith.constant dense<0.000000e+00> : vector<16xf32>
    %61 = vector.multi_reduction <add>, %60, %cst_38 [1] : vector<16x32xf32> to vector<16xf32>
    %62 = vector.shape_cast %61 : vector<16xf32> to vector<16x1xf32>
    %cst_39 = arith.constant 3.200000e+01 : f32
    %63 = vector.broadcast %cst_39 : f32 to vector<16x1xf32>
    %64 = arith.divf %62, %63 : vector<16x1xf32>
    %65 = vector.broadcast %57 : vector<16x1xf32> to vector<16x32xf32>
    %66 = arith.subf %49, %65 : vector<16x32xf32>
    %cst_40 = arith.constant 9.99999974E-6 : f32
    %67 = vector.broadcast %cst_40 : f32 to vector<16x1xf32>
    %68 = arith.addf %64, %67 : vector<16x1xf32>
    %69 = math.rsqrt %68 : vector<16x1xf32>
    %70 = vector.broadcast %69 : vector<16x1xf32> to vector<16x32xf32>
    %71 = arith.mulf %66, %70 : vector<16x32xf32>
    %72 = vector.broadcast %51 : vector<1x32xf32> to vector<16x32xf32>
    %73 = arith.mulf %71, %72 : vector<16x32xf32>
    %74 = vector.broadcast %53 : vector<1x32xf32> to vector<16x32xf32>
    %75 = arith.addf %73, %74 : vector<16x32xf32>
    %c0_41 = arith.constant 0 : index
    %c0_42 = arith.constant 0 : index
    %c0_43 = arith.constant 0 : index
    %76 = vector.load %arg12[%c0_41, %c0_42, %c0_43] : memref<1x32x64xf32, #tpu.memory_space<vmem>>, vector<1x32x64xf32>
    %77 = vector.shape_cast %76 : vector<1x32x64xf32> to vector<32x64xf32>
    %cst_44 = arith.constant dense<0.000000e+00> : vector<16x64xf32>
    %78 = tpu.matmul %75, %77, %cst_44 {dimension_numbers = #tpu.dot_dimension_numbers<[1], [0], [0], [1], [0, 0, 1, 1], [], []>} : vector<16x32xf32>, vector<32x64xf32>, vector<16x64xf32> -> vector<16x64xf32>
    %c0_45 = arith.constant 0 : index
    %c0_46 = arith.constant 0 : index
    %c0_47 = arith.constant 0 : index
    %79 = vector.load %arg13[%c0_45, %c0_46, %c0_47] : memref<1x1x64xf32, #tpu.memory_space<vmem>>, vector<1x1x64xf32>
    %80 = vector.shape_cast %79 : vector<1x1x64xf32> to vector<1x64xf32>
    %81 = vector.broadcast %80 : vector<1x64xf32> to vector<16x64xf32>
    %82 = arith.addf %78, %81 : vector<16x64xf32>
    %cst_48 = arith.constant 0.000000e+00 : f32
    %83 = vector.broadcast %cst_48 : f32 to vector<16x64xf32>
    %84 = arith.maximumf %82, %83 : vector<16x64xf32>
    %c0_49 = arith.constant 0 : index
    %c0_50 = arith.constant 0 : index
    %c0_51 = arith.constant 0 : index
    %85 = vector.load %arg14[%c0_49, %c0_50, %c0_51] : memref<1x64x32xf32, #tpu.memory_space<vmem>>, vector<1x64x32xf32>
    %86 = vector.shape_cast %85 : vector<1x64x32xf32> to vector<64x32xf32>
    %cst_52 = arith.constant dense<0.000000e+00> : vector<16x32xf32>
    %87 = tpu.matmul %84, %86, %cst_52 {dimension_numbers = #tpu.dot_dimension_numbers<[1], [0], [0], [1], [0, 0, 1, 1], [], []>} : vector<16x64xf32>, vector<64x32xf32>, vector<16x32xf32> -> vector<16x32xf32>
    %c0_53 = arith.constant 0 : index
    %c0_54 = arith.constant 0 : index
    %c0_55 = arith.constant 0 : index
    %88 = vector.load %arg15[%c0_53, %c0_54, %c0_55] : memref<1x1x32xf32, #tpu.memory_space<vmem>>, vector<1x1x32xf32>
    %89 = vector.shape_cast %88 : vector<1x1x32xf32> to vector<1x32xf32>
    %90 = vector.broadcast %89 : vector<1x32xf32> to vector<16x32xf32>
    %91 = arith.addf %87, %90 : vector<16x32xf32>
    %92 = arith.addf %75, %91 : vector<16x32xf32>
    %c0_56 = arith.constant 0 : index
    %c0_57 = arith.constant 0 : index
    %c0_58 = arith.constant 0 : index
    %93 = vector.load %arg16[%c0_56, %c0_57, %c0_58] : memref<1x1x32xf32, #tpu.memory_space<vmem>>, vector<1x1x32xf32>
    %94 = vector.shape_cast %93 : vector<1x1x32xf32> to vector<1x32xf32>
    %c0_59 = arith.constant 0 : index
    %c0_60 = arith.constant 0 : index
    %c0_61 = arith.constant 0 : index
    %95 = vector.load %arg17[%c0_59, %c0_60, %c0_61] : memref<1x1x32xf32, #tpu.memory_space<vmem>>, vector<1x1x32xf32>
    %96 = vector.shape_cast %95 : vector<1x1x32xf32> to vector<1x32xf32>
    %cst_62 = arith.constant dense<0.000000e+00> : vector<16xf32>
    %97 = vector.multi_reduction <add>, %92, %cst_62 [1] : vector<16x32xf32> to vector<16xf32>
    %98 = vector.shape_cast %97 : vector<16xf32> to vector<16x1xf32>
    %cst_63 = arith.constant 3.200000e+01 : f32
    %99 = vector.broadcast %cst_63 : f32 to vector<16x1xf32>
    %100 = arith.divf %98, %99 : vector<16x1xf32>
    %101 = vector.broadcast %100 : vector<16x1xf32> to vector<16x32xf32>
    %102 = arith.subf %92, %101 : vector<16x32xf32>
    %103 = arith.mulf %102, %102 : vector<16x32xf32>
    %cst_64 = arith.constant dense<0.000000e+00> : vector<16xf32>
    %104 = vector.multi_reduction <add>, %103, %cst_64 [1] : vector<16x32xf32> to vector<16xf32>
    %105 = vector.shape_cast %104 : vector<16xf32> to vector<16x1xf32>
    %cst_65 = arith.constant 3.200000e+01 : f32
    %106 = vector.broadcast %cst_65 : f32 to vector<16x1xf32>
    %107 = arith.divf %105, %106 : vector<16x1xf32>
    %108 = vector.broadcast %100 : vector<16x1xf32> to vector<16x32xf32>
    %109 = arith.subf %92, %108 : vector<16x32xf32>
    %cst_66 = arith.constant 9.99999974E-6 : f32
    %110 = vector.broadcast %cst_66 : f32 to vector<16x1xf32>
    %111 = arith.addf %107, %110 : vector<16x1xf32>
    %112 = math.rsqrt %111 : vector<16x1xf32>
    %113 = vector.broadcast %112 : vector<16x1xf32> to vector<16x32xf32>
    %114 = arith.mulf %109, %113 : vector<16x32xf32>
    %115 = vector.broadcast %94 : vector<1x32xf32> to vector<16x32xf32>
    %116 = arith.mulf %114, %115 : vector<16x32xf32>
    %117 = vector.broadcast %96 : vector<1x32xf32> to vector<16x32xf32>
    %118 = arith.addf %116, %117 : vector<16x32xf32>
    %c0_67 = arith.constant 0 : index
    %c0_68 = arith.constant 0 : index
    %119 = vector.load %arg19[%c0_67, %c0_68] : memref<16x32xf32, #tpu.memory_space<vmem>>, vector<16x32xf32>
    tpu.vector_store %arg19[%c0_67, %c0_68], %118 {strides = array<i32>} : memref<16x32xf32, #tpu.memory_space<vmem>>, vector<16x32xf32>,
    %c1_i32 = arith.constant 1 : i32
    %120 = arith.cmpi eq, %arg1, %c1_i32 : i32
    %121 = arith.extui %120 : i1 to i32
    %c0_i32_69 = arith.constant 0 : i32
    %122 = arith.cmpi ne, %121, %c0_i32_69 : i32
    scf.if %122 {
      %c0_70 = arith.constant 0 : index
      %c0_71 = arith.constant 0 : index
      %c0_72 = arith.constant 0 : index
      %123 = vector.load %arg18[%c0_70, %c0_71, %c0_72] : memref<1x16x32xf32, #tpu.memory_space<vmem>>, vector<1x16x32xf32>
      %124 = vector.shape_cast %123 : vector<1x16x32xf32> to vector<16x32xf32>
      %125 = vector.shape_cast %118 : vector<16x32xf32> to vector<1x16x32xf32>
      tpu.vector_store %arg18[%c0_70, %c0_71, %c0_72], %125 {strides = array<i32>} : memref<1x16x32xf32, #tpu.memory_space<vmem>>, vector<1x16x32xf32>,
    } else {
    }
    return
  }
  func.func @transform_0(%arg0: i32, %arg1: i32) -> (i32, i32, i32) {
    %c0_i32 = arith.constant 0 : i32
    %c0_i32_0 = arith.constant 0 : i32
    %c0_i32_1 = arith.constant 0 : i32
    return %arg0, %c0_i32, %c0_i32_0 : i32, i32, i32
  }
  func.func @transform_1(%arg0: i32, %arg1: i32) -> (i32, i32, i32) {
    %c0_i32 = arith.constant 0 : i32
    %c0_i32_0 = arith.constant 0 : i32
    %c0_i32_1 = arith.constant 0 : i32
    return %arg0, %c0_i32, %c0_i32_0 : i32, i32, i32
  }
  func.func @transform_2(%arg0: i32, %arg1: i32) -> (i32, i32, i32) {
    %c0_i32 = arith.constant 0 : i32
    %c0_i32_0 = arith.constant 0 : i32
    %c0_i32_1 = arith.constant 0 : i32
    return %arg1, %c0_i32, %c0_i32_0 : i32, i32, i32
  }
  func.func @transform_3(%arg0: i32, %arg1: i32) -> (i32, i32, i32) {
    %c0_i32 = arith.constant 0 : i32
    %c0_i32_0 = arith.constant 0 : i32
    %c0_i32_1 = arith.constant 0 : i32
    return %arg1, %c0_i32, %c0_i32_0 : i32, i32, i32
  }
  func.func @transform_4(%arg0: i32, %arg1: i32) -> (i32, i32, i32) {
    %c0_i32 = arith.constant 0 : i32
    %c0_i32_0 = arith.constant 0 : i32
    %c0_i32_1 = arith.constant 0 : i32
    return %arg1, %c0_i32, %c0_i32_0 : i32, i32, i32
  }
  func.func @transform_5(%arg0: i32, %arg1: i32) -> (i32, i32, i32) {
    %c0_i32 = arith.constant 0 : i32
    %c0_i32_0 = arith.constant 0 : i32
    %c0_i32_1 = arith.constant 0 : i32
    return %arg1, %c0_i32, %c0_i32_0 : i32, i32, i32
  }
  func.func @transform_6(%arg0: i32, %arg1: i32) -> (i32, i32, i32) {
    %c0_i32 = arith.constant 0 : i32
    %c0_i32_0 = arith.constant 0 : i32
    %c0_i32_1 = arith.constant 0 : i32
    return %arg1, %c0_i32, %c0_i32_0 : i32, i32, i32
  }
  func.func @transform_7(%arg0: i32, %arg1: i32) -> (i32, i32, i32) {
    %c0_i32 = arith.constant 0 : i32
    %c0_i32_0 = arith.constant 0 : i32
    %c0_i32_1 = arith.constant 0 : i32
    return %arg1, %c0_i32, %c0_i32_0 : i32, i32, i32
  }
  func.func @transform_8(%arg0: i32, %arg1: i32) -> (i32, i32, i32) {
    %c0_i32 = arith.constant 0 : i32
    %c0_i32_0 = arith.constant 0 : i32
    %c0_i32_1 = arith.constant 0 : i32
    return %arg1, %c0_i32, %c0_i32_0 : i32, i32, i32
  }
  func.func @transform_9(%arg0: i32, %arg1: i32) -> (i32, i32, i32) {
    %c0_i32 = arith.constant 0 : i32
    %c0_i32_0 = arith.constant 0 : i32
    %c0_i32_1 = arith.constant 0 : i32
    return %arg1, %c0_i32, %c0_i32_0 : i32, i32, i32
  }
  func.func @transform_10(%arg0: i32, %arg1: i32) -> (i32, i32, i32) {
    %c0_i32 = arith.constant 0 : i32
    %c0_i32_0 = arith.constant 0 : i32
    %c0_i32_1 = arith.constant 0 : i32
    return %arg1, %c0_i32, %c0_i32_0 : i32, i32, i32
  }
  func.func @transform_11(%arg0: i32, %arg1: i32) -> (i32, i32, i32) {
    %c0_i32 = arith.constant 0 : i32
    %c0_i32_0 = arith.constant 0 : i32
    %c0_i32_1 = arith.constant 0 : i32
    return %arg1, %c0_i32, %c0_i32_0 : i32, i32, i32
  }
  func.func @transform_12(%arg0: i32, %arg1: i32) -> (i32, i32, i32) {
    %c0_i32 = arith.constant 0 : i32
    %c0_i32_0 = arith.constant 0 : i32
    %c0_i32_1 = arith.constant 0 : i32
    return %arg1, %c0_i32, %c0_i32_0 : i32, i32, i32
  }
  func.func @transform_13(%arg0: i32, %arg1: i32) -> (i32, i32, i32) {
    %c0_i32 = arith.constant 0 : i32
    %c0_i32_0 = arith.constant 0 : i32
    %c0_i32_1 = arith.constant 0 : i32
    return %arg1, %c0_i32, %c0_i32_0 : i32, i32, i32
  }
  func.func @transform_14(%arg0: i32, %arg1: i32) -> (i32, i32, i32) {
    %c0_i32 = arith.constant 0 : i32
    %c0_i32_0 = arith.constant 0 : i32
    %c0_i32_1 = arith.constant 0 : i32
    return %arg1, %c0_i32, %c0_i32_0 : i32, i32, i32
  }
  func.func @transform_15(%arg0: i32, %arg1: i32) -> (i32, i32, i32) {
    %c0_i32 = arith.constant 0 : i32
    %c0_i32_0 = arith.constant 0 : i32
    %c0_i32_1 = arith.constant 0 : i32
    return %arg1, %c0_i32, %c0_i32_0 : i32, i32, i32
  }
  func.func @transform_16(%arg0: i32, %arg1: i32) -> (i32, i32, i32) {
    %c0_i32 = arith.constant 0 : i32
    %c0_i32_0 = arith.constant 0 : i32
    %c0_i32_1 = arith.constant 0 : i32
    return %arg0, %c0_i32, %c0_i32_0 : i32, i32, i32
  }
}

</mosaic_0001>

<llo_original>
// kernel: tpu_custom_call.1
$region0: #{tpu_custom_call.1}
  #allocation0 [shape = 'u32[]', space=smem, size = 0x4, offset = 0x4, fixed_abs, tag = 'smem constant byte address 0x4 - core index']
  #allocation1 [shape = 'u32[72,128]{1,0:T(1,128)}', space=vmem, size = 0x9000, scoped, tag = 'internal scratch']
  #allocation2 [shape = 'f32[16,32]{1,0:T(8,128)}', space=vmem, size = 0x2000, scoped, tag = 'scratch operand']
  %s0 = inlined_call_operand.hbm [shape: f32[2,16,32], index: 0, kind: input, shape index: {}]
  %s1 = inlined_call_operand.hbm [shape: f32[2,16,32], index: 1, kind: input, shape index: {}]
  %s2 = inlined_call_operand.vmem [shape: f32[2,32,64], index: 2, kind: input, shape index: {}]
  %s3 = inlined_call_operand.vmem [shape: f32[2,1,64], index: 3, kind: input, shape index: {}]
  %s4 = inlined_call_operand.vmem [shape: f32[2,32,32], index: 4, kind: input, shape index: {}]
  %s5 = inlined_call_operand.hbm [shape: f32[2,1,32], index: 5, kind: input, shape index: {}]
  %s6 = inlined_call_operand.vmem [shape: f32[2,32,32], index: 6, kind: input, shape index: {}]
  %s7 = inlined_call_operand.vmem [shape: f32[2,1,32], index: 7, kind: input, shape index: {}]
  %s8 = inlined_call_operand.hbm [shape: f32[2,1,32], index: 8, kind: input, shape index: {}]
  %s9 = inlined_call_operand.vmem [shape: f32[2,1,32], index: 9, kind: input, shape index: {}]
  %s10 = inlined_call_operand.hbm [shape: f32[2,32,64], index: 10, kind: input, shape index: {}]
  %s11 = inlined_call_operand.vmem [shape: f32[2,1,64], index: 11, kind: input, shape index: {}]
  %s12 = inlined_call_operand.vmem [shape: f32[2,64,32], index: 12, kind: input, shape index: {}]
  %s13 = inlined_call_operand.vmem [shape: f32[2,1,32], index: 13, kind: input, shape index: {}]
  %s14 = inlined_call_operand.hbm [shape: f32[2,1,32], index: 14, kind: input, shape index: {}]
  %s15 = inlined_call_operand.vmem [shape: f32[2,1,32], index: 15, kind: input, shape index: {}]
  %s16 = inlined_call_operand.hbm [shape: f32[2,16,32], index: 16, kind: output, shape index: {}]
  %s17 = sld [smem:[#allocation0]]
  $region129: #{tpu_custom_call.1} parent=0
    _
  %s19 = ssub.s32 1, %s17
  %s20 = scalar_select 0, %s19, %s17
  $region1: #{tpu_custom_call.1} parent=0
    #allocation3 [shape = 'u8[16384]{0}', space=vmem, size = 0x4000, scoped, tag = 'input window, operand 0']
    #allocation4 [shape = 's32[2]{0}', space=sflag, size = 0x8, scoped, tag = 'scoped memory for tpu_custom_call.1']
    #allocation5 [shape = 's32[2]{0}', space=sflag, size = 0x8, scoped, tag = 'scoped memory for tpu_custom_call.1']
    #allocation6 [shape = 'u8[16384]{0}', space=vmem, size = 0x4000, scoped, tag = 'input window, operand 1']
    #allocation7 [shape = 's32[2]{0}', space=sflag, size = 0x8, scoped, tag = 'scoped memory for tpu_custom_call.1']
    #allocation8 [shape = 'u8[1024]{0}', space=vmem, size = 0x400, scoped, tag = 'input window, operand 5']
    #allocation9 [shape = 'u8[1024]{0}', space=vmem, size = 0x400, scoped, tag = 'input window, operand 8']
    #allocation10 [shape = 's32[2]{0}', space=sflag, size = 0x8, scoped, tag = 'scoped memory for tpu_custom_call.1']
    #allocation11 [shape = 'u8[32768]{0}', space=vmem, size = 0x8000, scoped, tag = 'input window, operand 10']
    #allocation12 [shape = 'u8[1024]{0}', space=vmem, size = 0x400, scoped, tag = 'input window, operand 14']
    #allocation13 [shape = 's32[2]{0}', space=sflag, size = 0x8, scoped, tag = 'scoped memory for tpu_custom_call.1']
    #allocation14 [shape = 'u8[16384]{0}', space=vmem, size = 0x4000, scoped, tag = 'output window, operand 0']
    %21 = vsyncpa [#allocation4], 0
    %s22 = scalar_lea.sflag [#allocation4], 1
    %23 = vsyncpa %s22, 0
    %24 = vsyncpa [#allocation7], 0
    %s25 = scalar_lea.sflag [#allocation7], 1
    %26 = vsyncpa %s25, 0
    %27 = vsyncpa [#allocation10], 0
    %s28 = scalar_lea.sflag [#allocation10], 1
    %29 = vsyncpa %s28, 0
    %30 = vsyncpa [#allocation13], 0
    %s31 = scalar_lea.sflag [#allocation13], 1
    %32 = vsyncpa %s31, 0
    %33 = vsyncpa [#allocation5], 0
    %s34 = scalar_lea.sflag [#allocation5], 1
    %35 = vsyncpa %s34, 0
    loop: start=0, step=1, limit=6
    $region2: #{tpu_custom_call.1} parent=1 // loop_pre_header
      _
    $region3: #{tpu_custom_call.1} parent=1 // loop_header
      %s37 = sphi 0, %s41
      %p38 = scmp.ge.s32.totalorder %s37, 6
      %s44 = sphi 0, %s56
      %s45 = sphi 0, %s52
      %s46 = sphi 0, %s44
      %s47 = sphi 0, %s45
      %s48 = sphi 0, %s46
      %s49 = sphi 0, %s47
      %s59 = sphi 0, %s61
      %s62 = sphi 0, %s59
      %s63 = sphi 0, %s62
      %s79 = sphi 0, %s63
      %s85 = sphi 0, %s87
      %s88 = sphi 0, %s85
      %s89 = sphi 0, %s88
      %s105 = sphi 0, %s89
      %s111 = sphi 0, %s113
      %s114 = sphi 0, %s111
      %s115 = sphi 0, %s114
      %s131 = sphi 0, %s115
      %s137 = sphi 0, %s139
      %s140 = sphi 0, %s137
      %s141 = sphi 0, %s140
      %s157 = sphi 0, %s141
      %s163 = sphi 0, %s165
      %s166 = sphi 0, %s163
      %s167 = sphi 0, %s166
      %s183 = sphi 0, %s167
      %s189 = sphi 0, %s191
      %s192 = sphi 0, %s189
      %s193 = sphi 0, %s192
      %s209 = sphi 0, %s193
      %s215 = sphi 0, %s217
      %s218 = sphi 0, %s215
      %s219 = sphi 0, %s218
      %s235 = sphi 0, %s219
      %s241 = sphi 0, %s243
      %s244 = sphi 0, %s241
      %s245 = sphi 0, %s244
      %s261 = sphi 0, %s245
      %s267 = sphi 0, %s269
      %s270 = sphi 0, %s267
      %s271 = sphi 0, %s270
      %s287 = sphi 0, %s271
      %s293 = sphi 0, %s295
      %s296 = sphi 0, %s293
      %s297 = sphi 0, %s296
      %s313 = sphi 0, %s297
      %s319 = sphi 0, %s321
      %s322 = sphi 0, %s319
      %s323 = sphi 0, %s322
      %s339 = sphi 0, %s323
      %s345 = sphi 0, %s347
      %s348 = sphi 0, %s345
      %s349 = sphi 0, %s348
      %s365 = sphi 0, %s349
      %s371 = sphi 0, %s373
      %s374 = sphi 0, %s371
      %s375 = sphi 0, %s374
      %s391 = sphi 0, %s375
      %s397 = sphi 0, %s399
      %s400 = sphi 0, %s397
      %s401 = sphi 0, %s400
      %s417 = sphi 0, %s401
      %s423 = sphi 0, %s425
      %s426 = sphi 0, %s423
      %s427 = sphi 0, %s426
      %s443 = sphi 0, %s427
      %s449 = sphi 0, %s451
      %s452 = sphi 0, %s449
      %s453 = sphi 0, %s452
      %s469 = sphi 0, %s453
      %s475 = sphi 0, %s477
      %s478 = sphi 0, %s475
      %s479 = sphi 0, %s478
      %s495 = sphi 0, %s479
    $region4: #{tpu_custom_call.1} parent=1 // loop_header_branch
      %40 = sbr.rel (%p38) target = $region8
    $region5: #{tpu_custom_call.1} parent=1 // loop_body
      %s42 = ssub.s32 %s37, 1
      %s43 = ssub.s32 %s37, 2
      %s50 = sadd.s32 1, %s45
      %p51 = scmp.ge.s32.totalorder %s50, 2
      %s52 = scalar_select %p51, 0, %s50
      %s53 = sadd.s32 1, %s44
      %s54 = scalar_select %p51, %s53, %s44
      %p55 = scmp.ge.s32.totalorder %s54, 2
      %s56 = scalar_select %p55, 0, %s54
      %s57 = ssub.s32 %s44, %s56
      %p58 = scmp.eq.s32.totalorder %s57, 0
      %s60 = sadd.s32 %s59, 1
      %s61 = scalar_select %p58, %s59, %s60
      %p64 = pneg %p58
      %p65 = scmp.eq.s32.totalorder %s37, 3
      %p66 = por %p64, %p65
      %p67 = scmp.ne.s32.totalorder %s59, %s62
      %p68 = scmp.eq.s32.totalorder %s37, 0
      %p69 = por %p67, %p68
      %p70 = scmp.ne.s32.totalorder %s59, %s62
      %p71 = scmp.eq.s32.totalorder %s42, 3
      %p72 = por %p70, %p71
      %p73 = scmp.ne.s32.totalorder %s62, %s63
      %p74 = scmp.eq.s32.totalorder %s42, 0
      %p75 = por %p73, %p74
      %p76 = scmp.ne.s32.totalorder %s62, %s63
      %p77 = scmp.eq.s32.totalorder %s43, 3
      %p78 = por %p76, %p77
      %p80 = scmp.ne.s32.totalorder %s63, %s79
      %p81 = scmp.eq.s32.totalorder %s43, 0
      %p82 = por %p80, %p81
      %s83 = ssub.s32 %s44, %s56
      %p84 = scmp.eq.s32.totalorder %s83, 0
      %s86 = sadd.s32 %s85, 1
      %s87 = scalar_select %p84, %s85, %s86
      %p90 = pneg %p84
      %p91 = scmp.eq.s32.totalorder %s37, 3
      %p92 = por %p90, %p91
      %p93 = scmp.ne.s32.totalorder %s85, %s88
      %p94 = scmp.eq.s32.totalorder %s37, 0
      %p95 = por %p93, %p94
      %p96 = scmp.ne.s32.totalorder %s85, %s88
      %p97 = scmp.eq.s32.totalorder %s42, 3
      %p98 = por %p96, %p97
      %p99 = scmp.ne.s32.totalorder %s88, %s89
      %p100 = scmp.eq.s32.totalorder %s42, 0
      %p101 = por %p99, %p100
      %p102 = scmp.ne.s32.totalorder %s88, %s89
      %p103 = scmp.eq.s32.totalorder %s43, 3
      %p104 = por %p102, %p103
      %p106 = scmp.ne.s32.totalorder %s89, %s105
      %p107 = scmp.eq.s32.totalorder %s43, 0
      %p108 = por %p106, %p107
      %s109 = ssub.s32 %s45, %s52
      %p110 = scmp.eq.s32.totalorder %s109, 0
      %s112 = sadd.s32 %s111, 1
      %s113 = scalar_select %p110, %s111, %s112
      %p116 = pneg %p110
      %p117 = scmp.eq.s32.totalorder %s37, 3
      %p118 = por %p116, %p117
      %p119 = scmp.ne.s32.totalorder %s111, %s114
      %p120 = scmp.eq.s32.totalorder %s37, 0
      %p121 = por %p119, %p120
      %p122 = scmp.ne.s32.totalorder %s111, %s114
      %p123 = scmp.eq.s32.totalorder %s42, 3
      %p124 = por %p122, %p123
      %p125 = scmp.ne.s32.totalorder %s114, %s115
      %p126 = scmp.eq.s32.totalorder %s42, 0
      %p127 = por %p125, %p126
      %p128 = scmp.ne.s32.totalorder %s114, %s115
      %p129 = scmp.eq.s32.totalorder %s43, 3
      %p130 = por %p128, %p129
      %p132 = scmp.ne.s32.totalorder %s115, %s131
      %p133 = scmp.eq.s32.totalorder %s43, 0
      %p134 = por %p132, %p133
      %s135 = ssub.s32 %s45, %s52
      %p136 = scmp.eq.s32.totalorder %s135, 0
      %s138 = sadd.s32 %s137, 1
      %s139 = scalar_select %p136, %s137, %s138
      %p142 = pneg %p136
      %p143 = scmp.eq.s32.totalorder %s37, 3
      %p144 = por %p142, %p143
      %p145 = scmp.ne.s32.totalorder %s137, %s140
      %p146 = scmp.eq.s32.totalorder %s37, 0
      %p147 = por %p145, %p146
      %p148 = scmp.ne.s32.totalorder %s137, %s140
      %p149 = scmp.eq.s32.totalorder %s42, 3
      %p150 = por %p148, %p149
      %p151 = scmp.ne.s32.totalorder %s140, %s141
      %p152 = scmp.eq.s32.totalorder %s42, 0
      %p153 = por %p151, %p152
      %p154 = scmp.ne.s32.totalorder %s140, %s141
      %p155 = scmp.eq.s32.totalorder %s43, 3
      %p156 = por %p154, %p155
      %p158 = scmp.ne.s32.totalorder %s141, %s157
      %p159 = scmp.eq.s32.totalorder %s43, 0
      %p160 = por %p158, %p159
      %s161 = ssub.s32 %s45, %s52
      %p162 = scmp.eq.s32.totalorder %s161, 0
      %s164 = sadd.s32 %s163, 1
      %s165 = scalar_select %p162, %s163, %s164
      %p168 = pneg %p162
      %p169 = scmp.eq.s32.totalorder %s37, 3
      %p170 = por %p168, %p169
      %p171 = scmp.ne.s32.totalorder %s163, %s166
      %p172 = scmp.eq.s32.totalorder %s37, 0
      %p173 = por %p171, %p172
      %p174 = scmp.ne.s32.totalorder %s163, %s166
      %p175 = scmp.eq.s32.totalorder %s42, 3
      %p176 = por %p174, %p175
      %p177 = scmp.ne.s32.totalorder %s166, %s167
      %p178 = scmp.eq.s32.totalorder %s42, 0
      %p179 = por %p177, %p178
      %p180 = scmp.ne.s32.totalorder %s166, %s167
      %p181 = scmp.eq.s32.totalorder %s43, 3
      %p182 = por %p180, %p181
      %p184 = scmp.ne.s32.totalorder %s167, %s183
      %p185 = scmp.eq.s32.totalorder %s43, 0
      %p186 = por %p184, %p185
      %s187 = ssub.s32 %s45, %s52
      %p188 = scmp.eq.s32.totalorder %s187, 0
      %s190 = sadd.s32 %s189, 1
      %s191 = scalar_select %p188, %s189, %s190
      %p194 = pneg %p188
      %p195 = scmp.eq.s32.totalorder %s37, 3
      %p196 = por %p194, %p195
      %p197 = scmp.ne.s32.totalorder %s189, %s192
      %p198 = scmp.eq.s32.totalorder %s37, 0
      %p199 = por %p197, %p198
      %p200 = scmp.ne.s32.totalorder %s189, %s192
      %p201 = scmp.eq.s32.totalorder %s42, 3
      %p202 = por %p200, %p201
      %p203 = scmp.ne.s32.totalorder %s192, %s193
      %p204 = scmp.eq.s32.totalorder %s42, 0
      %p205 = por %p203, %p204
      %p206 = scmp.ne.s32.totalorder %s192, %s193
      %p207 = scmp.eq.s32.totalorder %s43, 3
      %p208 = por %p206, %p207
      %p210 = scmp.ne.s32.totalorder %s193, %s209
      %p211 = scmp.eq.s32.totalorder %s43, 0
      %p212 = por %p210, %p211
      %s213 = ssub.s32 %s45, %s52
      %p214 = scmp.eq.s32.totalorder %s213, 0
      %s216 = sadd.s32 %s215, 1
      %s217 = scalar_select %p214, %s215, %s216
      %p220 = pneg %p214
      %p221 = scmp.eq.s32.totalorder %s37, 3
      %p222 = por %p220, %p221
      %p223 = scmp.ne.s32.totalorder %s215, %s218
      %p224 = scmp.eq.s32.totalorder %s37, 0
      %p225 = por %p223, %p224
      %p226 = scmp.ne.s32.totalorder %s215, %s218
      %p227 = scmp.eq.s32.totalorder %s42, 3
      %p228 = por %p226, %p227
      %p229 = scmp.ne.s32.totalorder %s218, %s219
      %p230 = scmp.eq.s32.totalorder %s42, 0
      %p231 = por %p229, %p230
      %p232 = scmp.ne.s32.totalorder %s218, %s219
      %p233 = scmp.eq.s32.totalorder %s43, 3
      %p234 = por %p232, %p233
      %p236 = scmp.ne.s32.totalorder %s219, %s235
      %p237 = scmp.eq.s32.totalorder %s43, 0
      %p238 = por %p236, %p237
      %s239 = ssub.s32 %s45, %s52
      %p240 = scmp.eq.s32.totalorder %s239, 0
      %s242 = sadd.s32 %s241, 1
      %s243 = scalar_select %p240, %s241, %s242
      %p246 = pneg %p240
      %p247 = scmp.eq.s32.totalorder %s37, 3
      %p248 = por %p246, %p247
      %p249 = scmp.ne.s32.totalorder %s241, %s244
      %p250 = scmp.eq.s32.totalorder %s37, 0
      %p251 = por %p249, %p250
      %p252 = scmp.ne.s32.totalorder %s241, %s244
      %p253 = scmp.eq.s32.totalorder %s42, 3
      %p254 = por %p252, %p253
      %p255 = scmp.ne.s32.totalorder %s244, %s245
      %p256 = scmp.eq.s32.totalorder %s42, 0
      %p257 = por %p255, %p256
      %p258 = scmp.ne.s32.totalorder %s244, %s245
      %p259 = scmp.eq.s32.totalorder %s43, 3
      %p260 = por %p258, %p259
      %p262 = scmp.ne.s32.totalorder %s245, %s261
      %p263 = scmp.eq.s32.totalorder %s43, 0
      %p264 = por %p262, %p263
      %s265 = ssub.s32 %s45, %s52
      %p266 = scmp.eq.s32.totalorder %s265, 0
      %s268 = sadd.s32 %s267, 1
      %s269 = scalar_select %p266, %s267, %s268
      %p272 = pneg %p266
      %p273 = scmp.eq.s32.totalorder %s37, 3
      %p274 = por %p272, %p273
      %p275 = scmp.ne.s32.totalorder %s267, %s270
      %p276 = scmp.eq.s32.totalorder %s37, 0
      %p277 = por %p275, %p276
      %p278 = scmp.ne.s32.totalorder %s267, %s270
      %p279 = scmp.eq.s32.totalorder %s42, 3
      %p280 = por %p278, %p279
      %p281 = scmp.ne.s32.totalorder %s270, %s271
      %p282 = scmp.eq.s32.totalorder %s42, 0
      %p283 = por %p281, %p282
      %p284 = scmp.ne.s32.totalorder %s270, %s271
      %p285 = scmp.eq.s32.totalorder %s43, 3
      %p286 = por %p284, %p285
      %p288 = scmp.ne.s32.totalorder %s271, %s287
      %p289 = scmp.eq.s32.totalorder %s43, 0
      %p290 = por %p288, %p289
      %s291 = ssub.s32 %s45, %s52
      %p292 = scmp.eq.s32.totalorder %s291, 0
      %s294 = sadd.s32 %s293, 1
      %s295 = scalar_select %p292, %s293, %s294
      %p298 = pneg %p292
      %p299 = scmp.eq.s32.totalorder %s37, 3
      %p300 = por %p298, %p299
      %p301 = scmp.ne.s32.totalorder %s293, %s296
      %p302 = scmp.eq.s32.totalorder %s37, 0
      %p303 = por %p301, %p302
      %p304 = scmp.ne.s32.totalorder %s293, %s296
      %p305 = scmp.eq.s32.totalorder %s42, 3
      %p306 = por %p304, %p305
      %p307 = scmp.ne.s32.totalorder %s296, %s297
      %p308 = scmp.eq.s32.totalorder %s42, 0
      %p309 = por %p307, %p308
      %p310 = scmp.ne.s32.totalorder %s296, %s297
      %p311 = scmp.eq.s32.totalorder %s43, 3
      %p312 = por %p310, %p311
      %p314 = scmp.ne.s32.totalorder %s297, %s313
      %p315 = scmp.eq.s32.totalorder %s43, 0
      %p316 = por %p314, %p315
      %s317 = ssub.s32 %s45, %s52
      %p318 = scmp.eq.s32.totalorder %s317, 0
      %s320 = sadd.s32 %s319, 1
      %s321 = scalar_select %p318, %s319, %s320
      %p324 = pneg %p318
      %p325 = scmp.eq.s32.totalorder %s37, 3
      %p326 = por %p324, %p325
      %p327 = scmp.ne.s32.totalorder %s319, %s322
      %p328 = scmp.eq.s32.totalorder %s37, 0
      %p329 = por %p327, %p328
      %p330 = scmp.ne.s32.totalorder %s319, %s322
      %p331 = scmp.eq.s32.totalorder %s42, 3
      %p332 = por %p330, %p331
      %p333 = scmp.ne.s32.totalorder %s322, %s323
      %p334 = scmp.eq.s32.totalorder %s42, 0
      %p335 = por %p333, %p334
      %p336 = scmp.ne.s32.totalorder %s322, %s323
      %p337 = scmp.eq.s32.totalorder %s43, 3
      %p338 = por %p336, %p337
      %p340 = scmp.ne.s32.totalorder %s323, %s339
      %p341 = scmp.eq.s32.totalorder %s43, 0
      %p342 = por %p340, %p341
      %s343 = ssub.s32 %s45, %s52
      %p344 = scmp.eq.s32.totalorder %s343, 0
      %s346 = sadd.s32 %s345, 1
      %s347 = scalar_select %p344, %s345, %s346
      %p350 = pneg %p344
      %p351 = scmp.eq.s32.totalorder %s37, 3
      %p352 = por %p350, %p351
      %p353 = scmp.ne.s32.totalorder %s345, %s348
      %p354 = scmp.eq.s32.totalorder %s37, 0
      %p355 = por %p353, %p354
      %p356 = scmp.ne.s32.totalorder %s345, %s348
      %p357 = scmp.eq.s32.totalorder %s42, 3
      %p358 = por %p356, %p357
      %p359 = scmp.ne.s32.totalorder %s348, %s349
      %p360 = scmp.eq.s32.totalorder %s42, 0
      %p361 = por %p359, %p360
      %p362 = scmp.ne.s32.totalorder %s348, %s349
      %p363 = scmp.eq.s32.totalorder %s43, 3
      %p364 = por %p362, %p363
      %p366 = scmp.ne.s32.totalorder %s349, %s365
      %p367 = scmp.eq.s32.totalorder %s43, 0
      %p368 = por %p366, %p367
      %s369 = ssub.s32 %s45, %s52
      %p370 = scmp.eq.s32.totalorder %s369, 0
      %s372 = sadd.s32 %s371, 1
      %s373 = scalar_select %p370, %s371, %s372
      %p376 = pneg %p370
      %p377 = scmp.eq.s32.totalorder %s37, 3
      %p378 = por %p376, %p377
      %p379 = scmp.ne.s32.totalorder %s371, %s374
      %p380 = scmp.eq.s32.totalorder %s37, 0
      %p381 = por %p379, %p380
      %p382 = scmp.ne.s32.totalorder %s371, %s374
      %p383 = scmp.eq.s32.totalorder %s42, 3
      %p384 = por %p382, %p383
      %p385 = scmp.ne.s32.totalorder %s374, %s375
      %p386 = scmp.eq.s32.totalorder %s42, 0
      %p387 = por %p385, %p386
      %p388 = scmp.ne.s32.totalorder %s374, %s375
      %p389 = scmp.eq.s32.totalorder %s43, 3
      %p390 = por %p388, %p389
      %p392 = scmp.ne.s32.totalorder %s375, %s391
      %p393 = scmp.eq.s32.totalorder %s43, 0
      %p394 = por %p392, %p393
      %s395 = ssub.s32 %s45, %s52
      %p396 = scmp.eq.s32.totalorder %s395, 0
      %s398 = sadd.s32 %s397, 1
      %s399 = scalar_select %p396, %s397, %s398
      %p402 = pneg %p396
      %p403 = scmp.eq.s32.totalorder %s37, 3
      %p404 = por %p402, %p403
      %p405 = scmp.ne.s32.totalorder %s397, %s400
      %p406 = scmp.eq.s32.totalorder %s37, 0
      %p407 = por %p405, %p406
      %p408 = scmp.ne.s32.totalorder %s397, %s400
      %p409 = scmp.eq.s32.totalorder %s42, 3
      %p410 = por %p408, %p409
      %p411 = scmp.ne.s32.totalorder %s400, %s401
      %p412 = scmp.eq.s32.totalorder %s42, 0
      %p413 = por %p411, %p412
      %p414 = scmp.ne.s32.totalorder %s400, %s401
      %p415 = scmp.eq.s32.totalorder %s43, 3
      %p416 = por %p414, %p415
      %p418 = scmp.ne.s32.totalorder %s401, %s417
      %p419 = scmp.eq.s32.totalorder %s43, 0
      %p420 = por %p418, %p419
      %s421 = ssub.s32 %s45, %s52
      %p422 = scmp.eq.s32.totalorder %s421, 0
      %s424 = sadd.s32 %s423, 1
      %s425 = scalar_select %p422, %s423, %s424
      %p428 = pneg %p422
      %p429 = scmp.eq.s32.totalorder %s37, 3
      %p430 = por %p428, %p429
      %p431 = scmp.ne.s32.totalorder %s423, %s426
      %p432 = scmp.eq.s32.totalorder %s37, 0
      %p433 = por %p431, %p432
      %p434 = scmp.ne.s32.totalorder %s423, %s426
      %p435 = scmp.eq.s32.totalorder %s42, 3
      %p436 = por %p434, %p435
      %p437 = scmp.ne.s32.totalorder %s426, %s427
      %p438 = scmp.eq.s32.totalorder %s42, 0
      %p439 = por %p437, %p438
      %p440 = scmp.ne.s32.totalorder %s426, %s427
      %p441 = scmp.eq.s32.totalorder %s43, 3
      %p442 = por %p440, %p441
      %p444 = scmp.ne.s32.totalorder %s427, %s443
      %p445 = scmp.eq.s32.totalorder %s43, 0
      %p446 = por %p444, %p445
      %s447 = ssub.s32 %s45, %s52
      %p448 = scmp.eq.s32.totalorder %s447, 0
      %s450 = sadd.s32 %s449, 1
      %s451 = scalar_select %p448, %s449, %s450
      %p454 = pneg %p448
      %p455 = scmp.eq.s32.totalorder %s37, 3
      %p456 = por %p454, %p455
      %p457 = scmp.ne.s32.totalorder %s449, %s452
      %p458 = scmp.eq.s32.totalorder %s37, 0
      %p459 = por %p457, %p458
      %p460 = scmp.ne.s32.totalorder %s449, %s452
      %p461 = scmp.eq.s32.totalorder %s42, 3
      %p462 = por %p460, %p461
      %p463 = scmp.ne.s32.totalorder %s452, %s453
      %p464 = scmp.eq.s32.totalorder %s42, 0
      %p465 = por %p463, %p464
      %p466 = scmp.ne.s32.totalorder %s452, %s453
      %p467 = scmp.eq.s32.totalorder %s43, 3
      %p468 = por %p466, %p467
      %p470 = scmp.ne.s32.totalorder %s453, %s469
      %p471 = scmp.eq.s32.totalorder %s43, 0
      %p472 = por %p470, %p471
      %s473 = ssub.s32 %s44, %s56
      %p474 = scmp.eq.s32.totalorder %s473, 0
      %s476 = sadd.s32 %s475, 1
      %s477 = scalar_select %p474, %s475, %s476
      %p480 = pneg %p474
      %p481 = scmp.eq.s32.totalorder %s37, 3
      %p482 = por %p480, %p481
      %p483 = scmp.ne.s32.totalorder %s475, %s478
      %p484 = scmp.eq.s32.totalorder %s37, 0
      %p485 = por %p483, %p484
      %p486 = scmp.ne.s32.totalorder %s475, %s478
      %p487 = scmp.eq.s32.totalorder %s42, 3
      %p488 = por %p486, %p487
      %p489 = scmp.ne.s32.totalorder %s478, %s479
      %p490 = scmp.eq.s32.totalorder %s42, 0
      %p491 = por %p489, %p490
      %p492 = scmp.ne.s32.totalorder %s478, %s479
      %p493 = scmp.eq.s32.totalorder %s43, 3
      %p494 = por %p492, %p493
      %p496 = scmp.ne.s32.totalorder %s479, %s495
      %p497 = scmp.eq.s32.totalorder %s43, 0
      %p498 = por %p496, %p497
      %p499 = scmp.le.s32.totalorder 1, %s37
      %p500 = scmp.lt.s32.totalorder %s37, 5
      %p501 = pnand %p499, %p500
      %p502 = pneg %p501
      // Predicated region
      $region9: #{tpu_custom_call.1} parent=5 // pred_check
        _
      $region10: #{tpu_custom_call.1} parent=5 // pred_check_branch
        %504 = sbr.rel (%p501) target = $region12
      $region11: #{tpu_custom_call.1} parent=5 // pred_region
        %s505 = ssub.s32 %s37, 1
      $region12: #{tpu_custom_call.1} parent=5 // pred_fallthru
        _
      %p506 = scmp.lt.s32.totalorder %s37, 4
      // Predicated region
      $region13: #{tpu_custom_call.1} parent=5 // pred_check
        %p507 = pneg %p506
      $region14: #{tpu_custom_call.1} parent=5 // pred_check_branch
        %509 = sbr.rel (%p507) target = $region16
      $region15: #{tpu_custom_call.1} parent=5 // pred_region
        // Predicated region
        $region17: #{tpu_custom_call.1} parent=15 // pred_check
          %p510 = pneg %p69
        $region18: #{tpu_custom_call.1} parent=15 // pred_check_branch
          %512 = sbr.rel (%p510) target = $region20
        $region19: #{tpu_custom_call.1} parent=15 // pred_region
          %s513 = sand.u32 %s59, 1
          %s514 = scalar_lea.sflag [#allocation4], %s513
          %s515 = sand.u32 %s59, 1
          %s516 = smul.addr %s515, 16
          %s517 = scalar_lea.vmem [#allocation3], %s516
          %519 = vsyncadd %s514, 0
          %s520 = smul.addr %s44, 2
          %s521 = smul.addr %s520, 8
          %s522 = scalar_lea.hbm %s0, %s521
          %s523 = sshll.u32 %s522, 4
          %s524 = int_to_ptr.hbm [resolvable:$true] %s523
          %s525 = sshll.u32 %s517, 4
          %s526 = int_to_ptr.vmem [resolvable:$true] %s525
          %531 = dma.hbm_to_vmem [thread:$0]  %s524, 256, %s526, %s514, 128, 128, 8
        $region20: #{tpu_custom_call.1} parent=15 // pred_fallthru
          _
        // Predicated region
        $region21: #{tpu_custom_call.1} parent=15 // pred_check
          %p532 = pneg %p95
        $region22: #{tpu_custom_call.1} parent=15 // pred_check_branch
          %534 = sbr.rel (%p532) target = $region24
        $region23: #{tpu_custom_call.1} parent=15 // pred_region
          %s535 = sand.u32 %s37, 1
          %s536 = scalar_lea.sflag [#allocation7], %s535
          %s537 = sand.u32 %s85, 1
          %s538 = smul.addr %s537, 16
          %s539 = scalar_lea.vmem [#allocation6], %s538
          %541 = vsyncadd %s536, 0
          %s542 = smul.addr %s44, 2
          %s543 = smul.addr %s542, 8
          %s544 = scalar_lea.hbm %s1, %s543
          %s545 = sshll.u32 %s544, 4
          %s546 = int_to_ptr.hbm [resolvable:$true] %s545
          %s547 = sshll.u32 %s539, 4
          %s548 = int_to_ptr.vmem [resolvable:$true] %s547
          %553 = dma.hbm_to_vmem [thread:$0]  %s546, 256, %s548, %s536, 128, 128, 8
        $region24: #{tpu_custom_call.1} parent=15 // pred_fallthru
          _
        // Predicated region
        $region25: #{tpu_custom_call.1} parent=15 // pred_check
          %p554 = pneg %p121
        $region26: #{tpu_custom_call.1} parent=15 // pred_check_branch
          %556 = sbr.rel (%p554) target = $region28
        $region27: #{tpu_custom_call.1} parent=15 // pred_region
          %p557 = scmp.lt.s32.totalorder %s45, 1
          %s558 = scalar_select %p557, %s45, 1
          %s559 = smul.addr %s558, 4
          %s560 = smul.addr %s559, 8
          %s561 = scalar_lea.vmem %s2, %s560
        $region28: #{tpu_custom_call.1} parent=15 // pred_fallthru
          _
        // Predicated region
        $region29: #{tpu_custom_call.1} parent=15 // pred_check
          %p562 = pneg %p147
        $region30: #{tpu_custom_call.1} parent=15 // pred_check_branch
          %564 = sbr.rel (%p562) target = $region32
        $region31: #{tpu_custom_call.1} parent=15 // pred_region
          %p565 = scmp.lt.s32.totalorder %s45, 1
          %s566 = scalar_select %p565, %s45, 1
          %s567 = scalar_lea.vmem %s3, %s566
        $region32: #{tpu_custom_call.1} parent=15 // pred_fallthru
          _
        // Predicated region
        $region33: #{tpu_custom_call.1} parent=15 // pred_check
          %p568 = pneg %p173
        $region34: #{tpu_custom_call.1} parent=15 // pred_check_branch
          %570 = sbr.rel (%p568) target = $region36
        $region35: #{tpu_custom_call.1} parent=15 // pred_region
          %p571 = scmp.lt.s32.totalorder %s45, 1
          %s572 = scalar_select %p571, %s45, 1
          %s573 = smul.addr %s572, 4
          %s574 = smul.addr %s573, 8
          %s575 = scalar_lea.vmem %s4, %s574
        $region36: #{tpu_custom_call.1} parent=15 // pred_fallthru
          _
        // Predicated region
        $region37: #{tpu_custom_call.1} parent=15 // pred_check
          %p576 = pneg %p199
        $region38: #{tpu_custom_call.1} parent=15 // pred_check_branch
          %578 = sbr.rel (%p576) target = $region40
        $region39: #{tpu_custom_call.1} parent=15 // pred_region
          %s579 = sand.u32 %s37, 1
          %s580 = scalar_lea.sflag [#allocation7], %s579
          %s581 = sand.u32 %s189, 1
          %s582 = scalar_lea.vmem [#allocation8], %s581
          %584 = vsyncadd %s580, 0
          %s585 = scalar_lea.hbm %s5, %s45
          %s587 = sshll.u32 %s585, 4
          %s588 = int_to_ptr.hbm [resolvable:$true] %s587
          %s589 = sshll.u32 %s582, 4
          %s590 = int_to_ptr.vmem [resolvable:$true] %s589
          %592 = dma.hbm_to_vmem [thread:$0]  %s588, 16, %s590, %s580
        $region40: #{tpu_custom_call.1} parent=15 // pred_fallthru
          _
        // Predicated region
        $region41: #{tpu_custom_call.1} parent=15 // pred_check
          %p593 = pneg %p225
        $region42: #{tpu_custom_call.1} parent=15 // pred_check_branch
          %595 = sbr.rel (%p593) target = $region44
        $region43: #{tpu_custom_call.1} parent=15 // pred_region
          %p596 = scmp.lt.s32.totalorder %s45, 1
          %s597 = scalar_select %p596, %s45, 1
          %s598 = smul.addr %s597, 4
          %s599 = smul.addr %s598, 8
          %s600 = scalar_lea.vmem %s6, %s599
        $region44: #{tpu_custom_call.1} parent=15 // pred_fallthru
          _
        // Predicated region
        $region45: #{tpu_custom_call.1} parent=15 // pred_check
          %p601 = pneg %p251
        $region46: #{tpu_custom_call.1} parent=15 // pred_check_branch
          %603 = sbr.rel (%p601) target = $region48
        $region47: #{tpu_custom_call.1} parent=15 // pred_region
          %p604 = scmp.lt.s32.totalorder %s45, 1
          %s605 = scalar_select %p604, %s45, 1
          %s606 = scalar_lea.vmem %s7, %s605
        $region48: #{tpu_custom_call.1} parent=15 // pred_fallthru
          _
        // Predicated region
        $region49: #{tpu_custom_call.1} parent=15 // pred_check
          %p607 = pneg %p277
        $region50: #{tpu_custom_call.1} parent=15 // pred_check_branch
          %609 = sbr.rel (%p607) target = $region52
        $region51: #{tpu_custom_call.1} parent=15 // pred_region
          %s610 = sand.u32 %s37, 1
          %s611 = scalar_lea.sflag [#allocation10], %s610
          %s612 = sand.u32 %s267, 1
          %s613 = scalar_lea.vmem [#allocation9], %s612
          %615 = vsyncadd %s611, 0
          %s616 = scalar_lea.hbm %s8, %s45
          %s618 = sshll.u32 %s616, 4
          %s619 = int_to_ptr.hbm [resolvable:$true] %s618
          %s620 = sshll.u32 %s613, 4
          %s621 = int_to_ptr.vmem [resolvable:$true] %s620
          %623 = dma.hbm_to_vmem [thread:$0]  %s619, 16, %s621, %s611
        $region52: #{tpu_custom_call.1} parent=15 // pred_fallthru
          _
        // Predicated region
        $region53: #{tpu_custom_call.1} parent=15 // pred_check
          %p624 = pneg %p303
        $region54: #{tpu_custom_call.1} parent=15 // pred_check_branch
          %626 = sbr.rel (%p624) target = $region56
        $region55: #{tpu_custom_call.1} parent=15 // pred_region
          %p627 = scmp.lt.s32.totalorder %s45, 1
          %s628 = scalar_select %p627, %s45, 1
          %s629 = scalar_lea.vmem %s9, %s628
        $region56: #{tpu_custom_call.1} parent=15 // pred_fallthru
          _
        // Predicated region
        $region57: #{tpu_custom_call.1} parent=15 // pred_check
          %p630 = pneg %p329
        $region58: #{tpu_custom_call.1} parent=15 // pred_check_branch
          %632 = sbr.rel (%p630) target = $region60
        $region59: #{tpu_custom_call.1} parent=15 // pred_region
          %s633 = sand.u32 %s37, 1
          %s634 = scalar_lea.sflag [#allocation10], %s633
          %s635 = sand.u32 %s319, 1
          %s636 = smul.addr %s635, 32
          %s637 = scalar_lea.vmem [#allocation11], %s636
          %639 = vsyncadd %s634, 0
          %s640 = smul.addr %s45, 4
          %s641 = smul.addr %s640, 8
          %s642 = scalar_lea.hbm %s10, %s641
          %s643 = sshll.u32 %s642, 4
          %s644 = int_to_ptr.hbm [resolvable:$true] %s643
          %s645 = sshll.u32 %s637, 4
          %s646 = int_to_ptr.vmem [resolvable:$true] %s645
          %651 = dma.hbm_to_vmem [thread:$0]  %s644, 512, %s646, %s634, 128, 128, 8
        $region60: #{tpu_custom_call.1} parent=15 // pred_fallthru
          _
        // Predicated region
        $region61: #{tpu_custom_call.1} parent=15 // pred_check
          %p652 = pneg %p355
        $region62: #{tpu_custom_call.1} parent=15 // pred_check_branch
          %654 = sbr.rel (%p652) target = $region64
        $region63: #{tpu_custom_call.1} parent=15 // pred_region
          %p655 = scmp.lt.s32.totalorder %s45, 1
          %s656 = scalar_select %p655, %s45, 1
          %s657 = scalar_lea.vmem %s11, %s656
        $region64: #{tpu_custom_call.1} parent=15 // pred_fallthru
          _
        // Predicated region
        $region65: #{tpu_custom_call.1} parent=15 // pred_check
          %p658 = pneg %p381
        $region66: #{tpu_custom_call.1} parent=15 // pred_check_branch
          %660 = sbr.rel (%p658) target = $region68
        $region67: #{tpu_custom_call.1} parent=15 // pred_region
          %p661 = scmp.lt.s32.totalorder %s45, 1
          %s662 = scalar_select %p661, %s45, 1
          %s663 = smul.addr %s662, 8
          %s664 = smul.addr %s663, 8
          %s665 = scalar_lea.vmem %s12, %s664
        $region68: #{tpu_custom_call.1} parent=15 // pred_fallthru
          _
        // Predicated region
        $region69: #{tpu_custom_call.1} parent=15 // pred_check
          %p666 = pneg %p407
        $region70: #{tpu_custom_call.1} parent=15 // pred_check_branch
          %668 = sbr.rel (%p666) target = $region72
        $region71: #{tpu_custom_call.1} parent=15 // pred_region
          %p669 = scmp.lt.s32.totalorder %s45, 1
          %s670 = scalar_select %p669, %s45, 1
          %s671 = scalar_lea.vmem %s13, %s670
        $region72: #{tpu_custom_call.1} parent=15 // pred_fallthru
          _
        // Predicated region
        $region73: #{tpu_custom_call.1} parent=15 // pred_check
          %p672 = pneg %p433
        $region74: #{tpu_custom_call.1} parent=15 // pred_check_branch
          %674 = sbr.rel (%p672) target = $region76
        $region75: #{tpu_custom_call.1} parent=15 // pred_region
          %s675 = sand.u32 %s423, 1
          %s676 = scalar_lea.sflag [#allocation13], %s675
          %s677 = sand.u32 %s423, 1
          %s678 = scalar_lea.vmem [#allocation12], %s677
          %680 = vsyncadd %s676, 0
          %s681 = scalar_lea.hbm %s14, %s45
          %s683 = sshll.u32 %s681, 4
          %s684 = int_to_ptr.hbm [resolvable:$true] %s683
          %s685 = sshll.u32 %s678, 4
          %s686 = int_to_ptr.vmem [resolvable:$true] %s685
          %688 = dma.hbm_to_vmem [thread:$0]  %s684, 16, %s686, %s676
        $region76: #{tpu_custom_call.1} parent=15 // pred_fallthru
          _
        // Predicated region
        $region77: #{tpu_custom_call.1} parent=15 // pred_check
          %p689 = pneg %p459
        $region78: #{tpu_custom_call.1} parent=15 // pred_check_branch
          %691 = sbr.rel (%p689) target = $region80
        $region79: #{tpu_custom_call.1} parent=15 // pred_region
          %p692 = scmp.lt.s32.totalorder %s45, 1
          %s693 = scalar_select %p692, %s45, 1
          %s694 = scalar_lea.vmem %s15, %s693
        $region80: #{tpu_custom_call.1} parent=15 // pred_fallthru
          _
      $region16: #{tpu_custom_call.1} parent=5 // pred_fallthru
        _
      %p695 = scmp.le.s32.totalorder 1, %s37
      %p696 = scmp.lt.s32.totalorder %s37, 5
      %p697 = pnand %p695, %p696
      %p698 = pneg %p697
      // Predicated region
      $region81: #{tpu_custom_call.1} parent=5 // pred_check
        _
      $region82: #{tpu_custom_call.1} parent=5 // pred_check_branch
        %700 = sbr.rel (%p697) target = $region84
      $region83: #{tpu_custom_call.1} parent=5 // pred_region
        %s701 = ssub.s32 %s37, 1
        %s702 = sand.u32 %s62, 1
        %s703 = scalar_lea.sflag [#allocation4], %s702
        %s704 = sand.u32 %s62, 1
        %s705 = smul.addr %s704, 16
        %s706 = scalar_lea.vmem [#allocation3], %s705
        // Predicated region
        $region85: #{tpu_custom_call.1} parent=83 // pred_check
          %p707 = pneg %p75
        $region86: #{tpu_custom_call.1} parent=83 // pred_check_branch
          %709 = sbr.rel (%p707) target = $region88
        $region87: #{tpu_custom_call.1} parent=83 // pred_region
          %711 = dma.done %s703, 256
        $region88: #{tpu_custom_call.1} parent=83 // pred_fallthru
          _
        %s712 = sand.u32 %s42, 1
        %s713 = scalar_lea.sflag [#allocation7], %s712
        %s714 = sand.u32 %s88, 1
        %s715 = smul.addr %s714, 16
        %s716 = scalar_lea.vmem [#allocation6], %s715
        // Predicated region
        $region89: #{tpu_custom_call.1} parent=83 // pred_check
          %p717 = pneg %p101
        $region90: #{tpu_custom_call.1} parent=83 // pred_check_branch
          %719 = sbr.rel (%p717) target = $region92
        $region91: #{tpu_custom_call.1} parent=83 // pred_region
          %721 = dma.done %s713, 256
        $region92: #{tpu_custom_call.1} parent=83 // pred_fallthru
          _
        %s722 = sand.u32 %s42, 1
        %s723 = scalar_lea.sflag [#allocation7], %s722
        %s724 = sand.u32 %s192, 1
        %s725 = scalar_lea.vmem [#allocation8], %s724
        // Predicated region
        $region93: #{tpu_custom_call.1} parent=83 // pred_check
          %p726 = pneg %p205
        $region94: #{tpu_custom_call.1} parent=83 // pred_check_branch
          %728 = sbr.rel (%p726) target = $region96
        $region95: #{tpu_custom_call.1} parent=83 // pred_region
          %730 = dma.done %s723, 16
        $region96: #{tpu_custom_call.1} parent=83 // pred_fallthru
          _
        %s731 = sand.u32 %s42, 1
        %s732 = scalar_lea.sflag [#allocation10], %s731
        %s733 = sand.u32 %s270, 1
        %s734 = scalar_lea.vmem [#allocation9], %s733
        // Predicated region
        $region97: #{tpu_custom_call.1} parent=83 // pred_check
          %p735 = pneg %p283
        $region98: #{tpu_custom_call.1} parent=83 // pred_check_branch
          %737 = sbr.rel (%p735) target = $region100
        $region99: #{tpu_custom_call.1} parent=83 // pred_region
          %739 = dma.done %s732, 16
        $region100: #{tpu_custom_call.1} parent=83 // pred_fallthru
          _
        %s740 = sand.u32 %s42, 1
        %s741 = scalar_lea.sflag [#allocation10], %s740
        %s742 = sand.u32 %s322, 1
        %s743 = smul.addr %s742, 32
        %s744 = scalar_lea.vmem [#allocation11], %s743
        // Predicated region
        $region101: #{tpu_custom_call.1} parent=83 // pred_check
          %p745 = pneg %p335
        $region102: #{tpu_custom_call.1} parent=83 // pred_check_branch
          %747 = sbr.rel (%p745) target = $region104
        $region103: #{tpu_custom_call.1} parent=83 // pred_region
          %749 = dma.done %s741, 512
        $region104: #{tpu_custom_call.1} parent=83 // pred_fallthru
          _
        %s750 = sand.u32 %s426, 1
        %s751 = scalar_lea.sflag [#allocation13], %s750
        %s752 = sand.u32 %s426, 1
        %s753 = scalar_lea.vmem [#allocation12], %s752
        // Predicated region
        $region105: #{tpu_custom_call.1} parent=83 // pred_check
          %p754 = pneg %p439
        $region106: #{tpu_custom_call.1} parent=83 // pred_check_branch
          %756 = sbr.rel (%p754) target = $region108
        $region107: #{tpu_custom_call.1} parent=83 // pred_region
          %758 = dma.done %s751, 16
        $region108: #{tpu_custom_call.1} parent=83 // pred_fallthru
          _
        %s759 = sand.u32 %s62, 1
        %s760 = scalar_lea.sflag [#allocation4], %s759
        %s761 = sand.u32 %s62, 1
        %s762 = smul.addr %s761, 16
        %s763 = scalar_lea.vmem [#allocation3], %s762
        %p764 = pneg %p75
        %p765 = pneg %p72
        %s766 = sand.u32 %s42, 1
        %s767 = scalar_lea.sflag [#allocation7], %s766
        %s768 = sand.u32 %s88, 1
        %s769 = smul.addr %s768, 16
        %s770 = scalar_lea.vmem [#allocation6], %s769
        %p771 = pneg %p101
        %p772 = pneg %p98
        %p773 = scmp.lt.s32.totalorder %s47, 1
        %s774 = scalar_select %p773, %s47, 1
        %s775 = smul.addr %s774, 4
        %s776 = smul.addr %s775, 8
        %s777 = scalar_lea.vmem %s2, %s776
        %p778 = pneg %p127
        %p779 = pneg %p124
        %p780 = scmp.lt.s32.totalorder %s47, 1
        %s781 = scalar_select %p780, %s47, 1
        %s782 = scalar_lea.vmem %s3, %s781
        %p783 = pneg %p153
        %p784 = pneg %p150
        %p785 = scmp.lt.s32.totalorder %s47, 1
        %s786 = scalar_select %p785, %s47, 1
        %s787 = smul.addr %s786, 4
        %s788 = smul.addr %s787, 8
        %s789 = scalar_lea.vmem %s4, %s788
        %p790 = pneg %p179
        %p791 = pneg %p176
        %s792 = sand.u32 %s42, 1
        %s793 = scalar_lea.sflag [#allocation7], %s792
        %s794 = sand.u32 %s192, 1
        %s795 = scalar_lea.vmem [#allocation8], %s794
        %p796 = pneg %p205
        %p797 = pneg %p202
        %p798 = scmp.lt.s32.totalorder %s47, 1
        %s799 = scalar_select %p798, %s47, 1
        %s800 = smul.addr %s799, 4
        %s801 = smul.addr %s800, 8
        %s802 = scalar_lea.vmem %s6, %s801
        %p803 = pneg %p231
        %p804 = pneg %p228
        %p805 = scmp.lt.s32.totalorder %s47, 1
        %s806 = scalar_select %p805, %s47, 1
        %s807 = scalar_lea.vmem %s7, %s806
        %p808 = pneg %p257
        %p809 = pneg %p254
        %s810 = sand.u32 %s42, 1
        %s811 = scalar_lea.sflag [#allocation10], %s810
        %s812 = sand.u32 %s270, 1
        %s813 = scalar_lea.vmem [#allocation9], %s812
        %p814 = pneg %p283
        %p815 = pneg %p280
        %p816 = scmp.lt.s32.totalorder %s47, 1
        %s817 = scalar_select %p816, %s47, 1
        %s818 = scalar_lea.vmem %s9, %s817
        %p819 = pneg %p309
        %p820 = pneg %p306
        %s821 = sand.u32 %s42, 1
        %s822 = scalar_lea.sflag [#allocation10], %s821
        %s823 = sand.u32 %s322, 1
        %s824 = smul.addr %s823, 32
        %s825 = scalar_lea.vmem [#allocation11], %s824
        %p826 = pneg %p335
        %p827 = pneg %p332
        %p828 = scmp.lt.s32.totalorder %s47, 1
        %s829 = scalar_select %p828, %s47, 1
        %s830 = scalar_lea.vmem %s11, %s829
        %p831 = pneg %p361
        %p832 = pneg %p358
        %p833 = scmp.lt.s32.totalorder %s47, 1
        %s834 = scalar_select %p833, %s47, 1
        %s835 = smul.addr %s834, 8
        %s836 = smul.addr %s835, 8
        %s837 = scalar_lea.vmem %s12, %s836
        %p838 = pneg %p387
        %p839 = pneg %p384
        %p840 = scmp.lt.s32.totalorder %s47, 1
        %s841 = scalar_select %p840, %s47, 1
        %s842 = scalar_lea.vmem %s13, %s841
        %p843 = pneg %p413
        %p844 = pneg %p410
        %s845 = sand.u32 %s426, 1
        %s846 = scalar_lea.sflag [#allocation13], %s845
        %s847 = sand.u32 %s426, 1
        %s848 = scalar_lea.vmem [#allocation12], %s847
        %p849 = pneg %p439
        %p850 = pneg %p436
        %p851 = scmp.lt.s32.totalorder %s47, 1
        %s852 = scalar_select %p851, %s47, 1
        %s853 = scalar_lea.vmem %s15, %s852
        %p854 = pneg %p465
        %p855 = pneg %p462
        %p856 = pneg %p491
        %p857 = pneg %p488
        %s858 = sand.u32 %s478, 1
        %s859 = scalar_lea.sflag [#allocation5], %s858
        %s860 = sand.u32 %s478, 1
        %s861 = smul.addr %s860, 16
        %s862 = scalar_lea.vmem [#allocation14], %s861
        %p863 = scmp.lt.s32.totalorder %s47, 1
        %s864 = scalar_select %p863, %s47, 1
        %s865 = smul.addr %s864, 4
        %s866 = smul.addr %s865, 8
        %s867 = scalar_lea.vmem %s2, %s866
        %p868 = scmp.lt.s32.totalorder %s47, 1
        %s869 = scalar_select %p868, %s47, 1
        %s870 = scalar_lea.vmem %s3, %s869
        %p871 = scmp.lt.s32.totalorder %s47, 1
        %s872 = scalar_select %p871, %s47, 1
        %s873 = smul.addr %s872, 4
        %s874 = smul.addr %s873, 8
        %s875 = scalar_lea.vmem %s4, %s874
        %p876 = scmp.lt.s32.totalorder %s47, 1
        %s877 = scalar_select %p876, %s47, 1
        %s878 = smul.addr %s877, 4
        %s879 = smul.addr %s878, 8
        %s880 = scalar_lea.vmem %s6, %s879
        %p881 = scmp.lt.s32.totalorder %s47, 1
        %s882 = scalar_select %p881, %s47, 1
        %s883 = scalar_lea.vmem %s7, %s882
        %p884 = scmp.lt.s32.totalorder %s47, 1
        %s885 = scalar_select %p884, %s47, 1
        %s886 = scalar_lea.vmem %s9, %s885
        %p887 = scmp.lt.s32.totalorder %s47, 1
        %s888 = scalar_select %p887, %s47, 1
        %s889 = scalar_lea.vmem %s11, %s888
        %p890 = scmp.lt.s32.totalorder %s47, 1
        %s891 = scalar_select %p890, %s47, 1
        %s892 = smul.addr %s891, 8
        %s893 = smul.addr %s892, 8
        %s894 = scalar_lea.vmem %s12, %s893
        %p895 = scmp.lt.s32.totalorder %s47, 1
        %s896 = scalar_select %p895, %s47, 1
        %s897 = scalar_lea.vmem %s13, %s896
        %p898 = scmp.lt.s32.totalorder %s47, 1
        %s899 = scalar_select %p898, %s47, 1
        %s900 = scalar_lea.vmem %s15, %s899
        %p901 = scmp.eq.s32.totalorder %s47, 0
        // Predicated region
        $region109: #{tpu_custom_call.1} parent=83 // pred_check
          %p902 = pneg %p901
        $region110: #{tpu_custom_call.1} parent=83 // pred_check_branch
          %904 = sbr.rel (%p902) target = $region112
        $region111: #{tpu_custom_call.1} parent=83 // pred_region
          %v905 = vld [vmem:[%s706] sm:$0xff]
          %v906 = vld [vmem:[%s706 + $0x8] sm:$0xff]
          %vm907 = vcmask 261120
          %908 = vst.msk [vmem:[#allocation2] sm:$0xff] %vm907, %v905
          %909 = vst.msk [vmem:[#allocation2 + $0x8] sm:$0xff] %vm907, %v906
        $region112: #{tpu_custom_call.1} parent=83 // pred_fallthru
          _
        %v910 = vld [vmem:[#allocation2] sm:$0xff]
        %v911 = vld [vmem:[#allocation2 + $0x8] sm:$0xff]
        %v912 = vld [vmem:[%s716] sm:$0xff]
        %v913 = vld [vmem:[%s716 + $0x8] sm:$0xff]
        %v914 = vadd.f32 %v910, %v912
        %v915 = vadd.f32 %v911, %v913
        %v916 = vld [vmem:[%s867] sm:$0xff]
        %v917 = vld [vmem:[%s867 + $0x8] sm:$0xff]
        %v918 = vld [vmem:[%s867 + $0x10] sm:$0xff]
        %v919 = vld [vmem:[%s867 + $0x18] sm:$0xff]
        %v920 = vld [vmem:[%s870] sm:$0x1]
        %v922 = vperm.slane %v920, 0
        %vm924 = vcmask 261120
        %v926 = vsel %vm924, %v914, 0
        %v929 = vsel %vm924, %v915, 0
        %931 = vmatpush.msra.mxu0 0.0
        %932 = vmatpush.msra.mxu0 0.0
        %933 = vmatpush.msra.mxu0 0.0
        %934 = vmatpush.msra.mxu0 0.0
        %935 = vmatpush.msra.mxu0 0.0
        %936 = vmatpush.msra.mxu0 0.0
        %937 = vmatpush.msra.mxu0 0.0
        %938 = vmatpush.msra.mxu0 0.0
        %939 = vmatpush.msra.mxu0 0.0
        %940 = vmatpush.msra.mxu0 0.0
        %941 = vmatpush.msra.mxu0 0.0
        %942 = vmatpush.msra.mxu0 0.0
        %943 = vmatpush.msra.mxu0 %v919
        %944 = vmatpush.msra.mxu0 %v918
        %945 = vmatpush.msra.mxu0 %v917
        %946 = vmatpush.msra.mxu0 %v916
        %947 = vmatmul.f32.gmra.mxu0 %v926
        %v948 = vpop.f32.mrf.mxu0
        %v949 = vadd.f32 %v922, %v948
        %950 = vmatmul.f32.gmra.mxu0 %v929
        %v951 = vpop.f32.mrf.mxu0
        %v952 = vadd.f32 %v922, %v951
        %953 = vdwg.mxu0
        %v954 = vld [vmem:[%s875] sm:$0xff]
        %v955 = vld [vmem:[%s875 + $0x8] sm:$0xff]
        %v956 = vld [vmem:[%s875 + $0x10] sm:$0xff]
        %v957 = vld [vmem:[%s875 + $0x18] sm:$0xff]
        %v958 = vld [vmem:[%s725] sm:$0x1]
        %v960 = vperm.slane %v958, 0
        %v963 = vsel %vm924, %v910, 0
        %v966 = vsel %vm924, %v911, 0
        %968 = vmatpush.msra.mxu0 0.0
        %969 = vmatpush.msra.mxu0 0.0
        %970 = vmatpush.msra.mxu0 0.0
        %971 = vmatpush.msra.mxu0 0.0
        %972 = vmatpush.msra.mxu0 0.0
        %973 = vmatpush.msra.mxu0 0.0
        %974 = vmatpush.msra.mxu0 0.0
        %975 = vmatpush.msra.mxu0 0.0
        %976 = vmatpush.msra.mxu0 0.0
        %977 = vmatpush.msra.mxu0 0.0
        %978 = vmatpush.msra.mxu0 0.0
        %979 = vmatpush.msra.mxu0 0.0
        %980 = vmatpush.msra.mxu0 %v957
        %981 = vmatpush.msra.mxu0 %v956
        %982 = vmatpush.msra.mxu0 %v955
        %983 = vmatpush.msra.mxu0 %v954
        %984 = vmatmul.f32.gmra.mxu0 %v963
        %v985 = vpop.f32.mrf.mxu0
        %v986 = vadd.f32 %v960, %v985
        %987 = vmatmul.f32.gmra.mxu0 %v966
        %v988 = vpop.f32.mrf.mxu0
        %v989 = vadd.f32 %v960, %v988
        %990 = vdwg.mxu0
        %v991 = vmul.f32 %v949, 0.35355338
        %v992 = vmul.f32 %v952, 0.35355338
        %995 = vrot.lane.b32.xlu0 %v991, 120
        %v996 = vpop.permute.xlu0 %995
        %997 = vrot.lane.b32.xlu0 %v992, 120
        %v998 = vpop.permute.xlu0 %997
        %999 = vrot.lane.b32.xlu0 %v991, 112
        %v1000 = vpop.permute.xlu0 %999
        %1001 = vrot.lane.b32.xlu0 %v992, 112
        %v1002 = vpop.permute.xlu0 %1001
        %1003 = vrot.lane.b32.xlu0 %v991, 104
        %v1004 = vpop.permute.xlu0 %1003
        %1005 = vrot.lane.b32.xlu0 %v992, 104
        %v1006 = vpop.permute.xlu0 %1005
        %1009 = vrot.lane.b32.xlu0 %v949, 120
        %v1010 = vpop.permute.xlu0 %1009
        %1011 = vrot.lane.b32.xlu0 %v952, 120
        %v1012 = vpop.permute.xlu0 %1011
        %1013 = vrot.lane.b32.xlu0 %v949, 112
        %v1014 = vpop.permute.xlu0 %1013
        %1015 = vrot.lane.b32.xlu0 %v952, 112
        %v1016 = vpop.permute.xlu0 %1015
        %1017 = vrot.lane.b32.xlu0 %v949, 104
        %v1018 = vpop.permute.xlu0 %1017
        %1019 = vrot.lane.b32.xlu0 %v952, 104
        %v1020 = vpop.permute.xlu0 %1019
        %1023 = vrot.lane.b32.xlu0 %v986, 120
        %v1024 = vpop.permute.xlu0 %1023
        %1025 = vrot.lane.b32.xlu0 %v989, 120
        %v1026 = vpop.permute.xlu0 %1025
        %1029 = vrot.lane.b32.xlu0 %v986, 112
        %v1030 = vpop.permute.xlu0 %1029
        %1031 = vrot.lane.b32.xlu0 %v989, 112
        %v1032 = vpop.permute.xlu0 %1031
        %1035 = vrot.lane.b32.xlu0 %v986, 104
        %v1036 = vpop.permute.xlu0 %1035
        %1037 = vrot.lane.b32.xlu0 %v989, 104
        %v1038 = vpop.permute.xlu0 %1037
        %1041 = vrot.lane.b32.xlu0 %v949, 96
        %v1042 = vpop.permute.xlu0 %1041
        %1043 = vrot.lane.b32.xlu0 %v952, 96
        %v1044 = vpop.permute.xlu0 %1043
        %1045 = vrot.lane.b32.xlu0 %v1010, 96
        %v1046 = vpop.permute.xlu0 %1045
        %1047 = vrot.lane.b32.xlu0 %v1012, 96
        %v1048 = vpop.permute.xlu0 %1047
        %1049 = vrot.lane.b32.xlu0 %v1014, 96
        %v1050 = vpop.permute.xlu0 %1049
        %1051 = vrot.lane.b32.xlu0 %v1016, 96
        %v1052 = vpop.permute.xlu0 %1051
        %1053 = vrot.lane.b32.xlu0 %v1018, 96
        %v1054 = vpop.permute.xlu0 %1053
        %1055 = vrot.lane.b32.xlu0 %v1020, 96
        %v1056 = vpop.permute.xlu0 %1055
        %1065 = vxpose.xlu0.b32.start [1/16] %v1042, 128
        %1066 = vxpose.xlu0.b32.cont [2/16] %v1044, 128
        %1067 = vxpose.xlu0.b32.cont [3/16] 0.0, 128
        %1068 = vxpose.xlu0.b32.cont [4/16] 0.0, 128
        %1069 = vxpose.xlu0.b32.cont [5/16] 0.0, 128
        %1070 = vxpose.xlu0.b32.cont [6/16] 0.0, 128
        %1071 = vxpose.xlu0.b32.cont [7/16] 0.0, 128
        %1072 = vxpose.xlu0.b32.cont [8/16] 0.0, 128
        %1073 = vxpose.xlu0.b32.cont [9/16] 0.0, 128
        %1074 = vxpose.xlu0.b32.cont [10/16] 0.0, 128
        %1075 = vxpose.xlu0.b32.cont [11/16] 0.0, 128
        %1076 = vxpose.xlu0.b32.cont [12/16] 0.0, 128
        %1077 = vxpose.xlu0.b32.cont [13/16] 0.0, 128
        %1078 = vxpose.xlu0.b32.cont [14/16] 0.0, 128
        %1079 = vxpose.xlu0.b32.cont [15/16] 0.0, 128
        %1080 = vxpose.xlu0.b32.end [16/16] 0.0, 128
        %v1081 = vpop.trf.xlu0
        %v1082 = vpop.trf.xlu0
        %v1083 = vpop.trf.xlu0
        %v1084 = vpop.trf.xlu0
        %v1085 = vpop.trf.xlu0
        %v1086 = vpop.trf.xlu0
        %v1087 = vpop.trf.xlu0
        %v1088 = vpop.trf.xlu0
        %v1089 = vpop.trf.xlu0
        %v1090 = vpop.trf.xlu0
        %v1091 = vpop.trf.xlu0
        %v1092 = vpop.trf.xlu0
        %v1093 = vpop.trf.xlu0
        %v1094 = vpop.trf.xlu0
        %v1095 = vpop.trf.xlu0
        %v1096 = vpop.trf.xlu0
        %1097 = vxpose.xlu0.b32.start [1/16] %v1046, 128
        %1098 = vxpose.xlu0.b32.cont [2/16] %v1048, 128
        %1099 = vxpose.xlu0.b32.cont [3/16] 0.0, 128
        %1100 = vxpose.xlu0.b32.cont [4/16] 0.0, 128
        %1101 = vxpose.xlu0.b32.cont [5/16] 0.0, 128
        %1102 = vxpose.xlu0.b32.cont [6/16] 0.0, 128
        %1103 = vxpose.xlu0.b32.cont [7/16] 0.0, 128
        %1104 = vxpose.xlu0.b32.cont [8/16] 0.0, 128
        %1105 = vxpose.xlu0.b32.cont [9/16] 0.0, 128
        %1106 = vxpose.xlu0.b32.cont [10/16] 0.0, 128
        %1107 = vxpose.xlu0.b32.cont [11/16] 0.0, 128
        %1108 = vxpose.xlu0.b32.cont [12/16] 0.0, 128
        %1109 = vxpose.xlu0.b32.cont [13/16] 0.0, 128
        %1110 = vxpose.xlu0.b32.cont [14/16] 0.0, 128
        %1111 = vxpose.xlu0.b32.cont [15/16] 0.0, 128
        %1112 = vxpose.xlu0.b32.end [16/16] 0.0, 128
        %v1113 = vpop.trf.xlu0
        %v1114 = vpop.trf.xlu0
        %v1115 = vpop.trf.xlu0
        %v1116 = vpop.trf.xlu0
        %v1117 = vpop.trf.xlu0
        %v1118 = vpop.trf.xlu0
        %v1119 = vpop.trf.xlu0
        %v1120 = vpop.trf.xlu0
        %v1121 = vpop.trf.xlu0
        %v1122 = vpop.trf.xlu0
        %v1123 = vpop.trf.xlu0
        %v1124 = vpop.trf.xlu0
        %v1125 = vpop.trf.xlu0
        %v1126 = vpop.trf.xlu0
        %v1127 = vpop.trf.xlu0
        %v1128 = vpop.trf.xlu0
        %1129 = vxpose.xlu0.b32.start [1/16] %v1050, 128
        %1130 = vxpose.xlu0.b32.cont [2/16] %v1052, 128
        %1131 = vxpose.xlu0.b32.cont [3/16] 0.0, 128
        %1132 = vxpose.xlu0.b32.cont [4/16] 0.0, 128
        %1133 = vxpose.xlu0.b32.cont [5/16] 0.0, 128
        %1134 = vxpose.xlu0.b32.cont [6/16] 0.0, 128
        %1135 = vxpose.xlu0.b32.cont [7/16] 0.0, 128
        %1136 = vxpose.xlu0.b32.cont [8/16] 0.0, 128
        %1137 = vxpose.xlu0.b32.cont [9/16] 0.0, 128
        %1138 = vxpose.xlu0.b32.cont [10/16] 0.0, 128
        %1139 = vxpose.xlu0.b32.cont [11/16] 0.0, 128
        %1140 = vxpose.xlu0.b32.cont [12/16] 0.0, 128
        %1141 = vxpose.xlu0.b32.cont [13/16] 0.0, 128
        %1142 = vxpose.xlu0.b32.cont [14/16] 0.0, 128
        %1143 = vxpose.xlu0.b32.cont [15/16] 0.0, 128
        %1144 = vxpose.xlu0.b32.end [16/16] 0.0, 128
        %v1145 = vpop.trf.xlu0
        %v1146 = vpop.trf.xlu0
        %v1147 = vpop.trf.xlu0
        %v1148 = vpop.trf.xlu0
        %v1149 = vpop.trf.xlu0
        %v1150 = vpop.trf.xlu0
        %v1151 = vpop.trf.xlu0
        %v1152 = vpop.trf.xlu0
        %v1153 = vpop.trf.xlu0
        %v1154 = vpop.trf.xlu0
        %v1155 = vpop.trf.xlu0
        %v1156 = vpop.trf.xlu0
        %v1157 = vpop.trf.xlu0
        %v1158 = vpop.trf.xlu0
        %v1159 = vpop.trf.xlu0
        %v1160 = vpop.trf.xlu0
        %1161 = vxpose.xlu0.b32.start [1/16] %v1054, 128
        %1162 = vxpose.xlu0.b32.cont [2/16] %v1056, 128
        %1163 = vxpose.xlu0.b32.cont [3/16] 0.0, 128
        %1164 = vxpose.xlu0.b32.cont [4/16] 0.0, 128
        %1165 = vxpose.xlu0.b32.cont [5/16] 0.0, 128
        %1166 = vxpose.xlu0.b32.cont [6/16] 0.0, 128
        %1167 = vxpose.xlu0.b32.cont [7/16] 0.0, 128
        %1168 = vxpose.xlu0.b32.cont [8/16] 0.0, 128
        %1169 = vxpose.xlu0.b32.cont [9/16] 0.0, 128
        %1170 = vxpose.xlu0.b32.cont [10/16] 0.0, 128
        %1171 = vxpose.xlu0.b32.cont [11/16] 0.0, 128
        %1172 = vxpose.xlu0.b32.cont [12/16] 0.0, 128
        %1173 = vxpose.xlu0.b32.cont [13/16] 0.0, 128
        %1174 = vxpose.xlu0.b32.cont [14/16] 0.0, 128
        %1175 = vxpose.xlu0.b32.cont [15/16] 0.0, 128
        %1176 = vxpose.xlu0.b32.end [16/16] 0.0, 128
        %v1177 = vpop.trf.xlu0
        %v1178 = vpop.trf.xlu0
        %v1179 = vpop.trf.xlu0
        %v1180 = vpop.trf.xlu0
        %v1181 = vpop.trf.xlu0
        %v1182 = vpop.trf.xlu0
        %v1183 = vpop.trf.xlu0
        %v1184 = vpop.trf.xlu0
        %v1185 = vpop.trf.xlu0
        %v1186 = vpop.trf.xlu0
        %v1187 = vpop.trf.xlu0
        %v1188 = vpop.trf.xlu0
        %v1189 = vpop.trf.xlu0
        %v1190 = vpop.trf.xlu0
        %v1191 = vpop.trf.xlu0
        %v1192 = vpop.trf.xlu0
        %vm1193 = vcmask 64512
        %v1194 = vsel %vm1193, %v991, 0
        %v1196 = vsel %vm1193, %v992, 0
        %1198 = vmatpush.msra.mxu0 0.0
        %1199 = vmatpush.msra.mxu0 0.0
        %1200 = vmatpush.msra.mxu0 0.0
        %1201 = vmatpush.msra.mxu0 0.0
        %1202 = vmatpush.msra.mxu0 0.0
        %1203 = vmatpush.msra.mxu0 0.0
        %1204 = vmatpush.msra.mxu0 0.0
        %1205 = vmatpush.msra.mxu0 0.0
        %1206 = vmatpush.msra.mxu0 0.0
        %1207 = vmatpush.msra.mxu0 0.0
        %1208 = vmatpush.msra.mxu0 0.0
        %1209 = vmatpush.msra.mxu0 0.0
        %1210 = vmatpush.msra.mxu0 0.0
        %1211 = vmatpush.msra.mxu0 0.0
        %1212 = vmatpush.msra.mxu0 0.0
        %1213 = vmatpush.msra.mxu0 %v1081
        %1214 = vmatmul.f32.gmra.mxu0 %v1194
        %v1215 = vpop.f32.mrf.mxu0
        %v1216 = vadd.f32 0.0, %v1215
        %1217 = vmatmul.f32.gmra.mxu0 %v1196
        %v1218 = vpop.f32.mrf.mxu0
        %v1219 = vadd.f32 0.0, %v1218
        %1220 = vdwg.mxu0
        %v1221 = vsel %vm1193, %v996, 0
        %v1223 = vsel %vm1193, %v998, 0
        %1225 = vmatpush.msra.mxu0 0.0
        %1226 = vmatpush.msra.mxu0 0.0
        %1227 = vmatpush.msra.mxu0 0.0
        %1228 = vmatpush.msra.mxu0 0.0
        %1229 = vmatpush.msra.mxu0 0.0
        %1230 = vmatpush.msra.mxu0 0.0
        %1231 = vmatpush.msra.mxu0 0.0
        %1232 = vmatpush.msra.mxu0 0.0
        %1233 = vmatpush.msra.mxu0 0.0
        %1234 = vmatpush.msra.mxu0 0.0
        %1235 = vmatpush.msra.mxu0 0.0
        %1236 = vmatpush.msra.mxu0 0.0
        %1237 = vmatpush.msra.mxu0 0.0
        %1238 = vmatpush.msra.mxu0 0.0
        %1239 = vmatpush.msra.mxu0 0.0
        %1240 = vmatpush.msra.mxu0 %v1113
        %1241 = vmatmul.f32.gmra.mxu0 %v1221
        %v1242 = vpop.f32.mrf.mxu0
        %v1243 = vadd.f32 0.0, %v1242
        %1244 = vmatmul.f32.gmra.mxu0 %v1223
        %v1245 = vpop.f32.mrf.mxu0
        %v1246 = vadd.f32 0.0, %v1245
        %1247 = vdwg.mxu0
        %v1248 = vsel %vm1193, %v1000, 0
        %v1250 = vsel %vm1193, %v1002, 0
        %1252 = vmatpush.msra.mxu0 0.0
        %1253 = vmatpush.msra.mxu0 0.0
        %1254 = vmatpush.msra.mxu0 0.0
        %1255 = vmatpush.msra.mxu0 0.0
        %1256 = vmatpush.msra.mxu0 0.0
        %1257 = vmatpush.msra.mxu0 0.0
        %1258 = vmatpush.msra.mxu0 0.0
        %1259 = vmatpush.msra.mxu0 0.0
        %1260 = vmatpush.msra.mxu0 0.0
        %1261 = vmatpush.msra.mxu0 0.0
        %1262 = vmatpush.msra.mxu0 0.0
        %1263 = vmatpush.msra.mxu0 0.0
        %1264 = vmatpush.msra.mxu0 0.0
        %1265 = vmatpush.msra.mxu0 0.0
        %1266 = vmatpush.msra.mxu0 0.0
        %1267 = vmatpush.msra.mxu0 %v1145
        %1268 = vmatmul.f32.gmra.mxu0 %v1248
        %v1269 = vpop.f32.mrf.mxu0
        %v1270 = vadd.f32 0.0, %v1269
        %1271 = vmatmul.f32.gmra.mxu0 %v1250
        %v1272 = vpop.f32.mrf.mxu0
        %v1273 = vadd.f32 0.0, %v1272
        %1274 = vdwg.mxu0
        %v1275 = vsel %vm1193, %v1004, 0
        %v1277 = vsel %vm1193, %v1006, 0
        %1279 = vmatpush.msra.mxu0 0.0
        %1280 = vmatpush.msra.mxu0 0.0
        %1281 = vmatpush.msra.mxu0 0.0
        %1282 = vmatpush.msra.mxu0 0.0
        %1283 = vmatpush.msra.mxu0 0.0
        %1284 = vmatpush.msra.mxu0 0.0
        %1285 = vmatpush.msra.mxu0 0.0
        %1286 = vmatpush.msra.mxu0 0.0
        %1287 = vmatpush.msra.mxu0 0.0
        %1288 = vmatpush.msra.mxu0 0.0
        %1289 = vmatpush.msra.mxu0 0.0
        %1290 = vmatpush.msra.mxu0 0.0
        %1291 = vmatpush.msra.mxu0 0.0
        %1292 = vmatpush.msra.mxu0 0.0
        %1293 = vmatpush.msra.mxu0 0.0
        %1294 = vmatpush.msra.mxu0 %v1177
        %1295 = vmatmul.f32.gmra.mxu0 %v1275
        %v1296 = vpop.f32.mrf.mxu0
        %v1297 = vadd.f32 0.0, %v1296
        %1298 = vmatmul.f32.gmra.mxu0 %v1277
        %v1299 = vpop.f32.mrf.mxu0
        %v1300 = vadd.f32 0.0, %v1299
        %1301 = vdwg.mxu0
        %vm1302 = vcmask 130048
        %v1303 = vsel %vm1302, %v1216, -inf
        %1304 = vmax.xlane.f32.xlu0 %v1303
        %v1305 = vpop.xlane.xlu0 %1304
        %v1306 = vsel %vm1302, %v1219, -inf
        %1307 = vmax.xlane.f32.xlu0 %v1306
        %v1308 = vpop.xlane.xlu0 %1307
        %v1309 = vsel %vm1302, %v1243, -inf
        %1310 = vmax.xlane.f32.xlu0 %v1309
        %v1311 = vpop.xlane.xlu0 %1310
        %v1312 = vsel %vm1302, %v1246, -inf
        %1313 = vmax.xlane.f32.xlu0 %v1312
        %v1314 = vpop.xlane.xlu0 %1313
        %v1315 = vsel %vm1302, %v1270, -inf
        %1316 = vmax.xlane.f32.xlu0 %v1315
        %v1317 = vpop.xlane.xlu0 %1316
        %v1318 = vsel %vm1302, %v1273, -inf
        %1319 = vmax.xlane.f32.xlu0 %v1318
        %v1320 = vpop.xlane.xlu0 %1319
        %v1321 = vsel %vm1302, %v1297, -inf
        %1322 = vmax.xlane.f32.xlu0 %v1321
        %v1323 = vpop.xlane.xlu0 %1322
        %v1324 = vsel %vm1302, %v1300, -inf
        %1325 = vmax.xlane.f32.xlu0 %v1324
        %v1326 = vpop.xlane.xlu0 %1325
        %v1327 = vsub.f32 %v1216, %v1305
        %v1328 = vsub.f32 %v1219, %v1308
        %v1329 = vsub.f32 %v1243, %v1311
        %v1330 = vsub.f32 %v1246, %v1314
        %v1331 = vsub.f32 %v1270, %v1317
        %v1332 = vsub.f32 %v1273, %v1320
        %v1333 = vsub.f32 %v1297, %v1323
        %v1334 = vsub.f32 %v1300, %v1326
        %v1335 = vmul.f32 %v1327, 1.442695
        %v1336 = vpow.pop %v1335
        %v1337 = vmul.f32 %v1328, 1.442695
        %v1338 = vpow.pop %v1337
        %v1339 = vmul.f32 %v1329, 1.442695
        %v1340 = vpow.pop %v1339
        %v1341 = vmul.f32 %v1330, 1.442695
        %v1342 = vpow.pop %v1341
        %v1343 = vmul.f32 %v1331, 1.442695
        %v1344 = vpow.pop %v1343
        %v1345 = vmul.f32 %v1332, 1.442695
        %v1346 = vpow.pop %v1345
        %v1347 = vmul.f32 %v1333, 1.442695
        %v1348 = vpow.pop %v1347
        %v1349 = vmul.f32 %v1334, 1.442695
        %v1350 = vpow.pop %v1349
        %v1351 = vsel %vm1302, %v1336, 0.0
        %1352 = vadd.xlane.f32.xlu0 %v1351
        %v1353 = vpop.xlane.xlu0 %1352
        %v1354 = vsel %vm1302, %v1338, 0.0
        %1355 = vadd.xlane.f32.xlu0 %v1354
        %v1356 = vpop.xlane.xlu0 %1355
        %v1357 = vsel %vm1302, %v1340, 0.0
        %1358 = vadd.xlane.f32.xlu0 %v1357
        %v1359 = vpop.xlane.xlu0 %1358
        %v1360 = vsel %vm1302, %v1342, 0.0
        %1361 = vadd.xlane.f32.xlu0 %v1360
        %v1362 = vpop.xlane.xlu0 %1361
        %v1363 = vsel %vm1302, %v1344, 0.0
        %1364 = vadd.xlane.f32.xlu0 %v1363
        %v1365 = vpop.xlane.xlu0 %1364
        %v1366 = vsel %vm1302, %v1346, 0.0
        %1367 = vadd.xlane.f32.xlu0 %v1366
        %v1368 = vpop.xlane.xlu0 %1367
        %v1369 = vsel %vm1302, %v1348, 0.0
        %1370 = vadd.xlane.f32.xlu0 %v1369
        %v1371 = vpop.xlane.xlu0 %1370
        %v1372 = vsel %vm1302, %v1350, 0.0
        %1373 = vadd.xlane.f32.xlu0 %v1372
        %v1374 = vpop.xlane.xlu0 %1373
        %v1375 = vrcp.pop %v1353
        %v1376 = vrcp.pop %v1356
        %v1377 = vrcp.pop %v1359
        %v1378 = vrcp.pop %v1362
        %v1379 = vrcp.pop %v1365
        %v1380 = vrcp.pop %v1368
        %v1381 = vrcp.pop %v1371
        %v1382 = vrcp.pop %v1374
        %v1383 = vmul.f32 %v1336, %v1375
        %v1384 = vmul.f32 %v1338, %v1376
        %v1385 = vmul.f32 %v1340, %v1377
        %v1386 = vmul.f32 %v1342, %v1378
        %v1387 = vmul.f32 %v1344, %v1379
        %v1388 = vmul.f32 %v1346, %v1380
        %v1389 = vmul.f32 %v1348, %v1381
        %v1390 = vmul.f32 %v1350, %v1382
        %1391 = vxpose.xlu0.b32.start [1/16] %v986, 128
        %1392 = vxpose.xlu0.b32.cont [2/16] %v989, 128
        %1393 = vxpose.xlu0.b32.cont [3/16] 0.0, 128
        %1394 = vxpose.xlu0.b32.cont [4/16] 0.0, 128
        %1395 = vxpose.xlu0.b32.cont [5/16] 0.0, 128
        %1396 = vxpose.xlu0.b32.cont [6/16] 0.0, 128
        %1397 = vxpose.xlu0.b32.cont [7/16] 0.0, 128
        %1398 = vxpose.xlu0.b32.cont [8/16] 0.0, 128
        %1399 = vxpose.xlu0.b32.cont [9/16] 0.0, 128
        %1400 = vxpose.xlu0.b32.cont [10/16] 0.0, 128
        %1401 = vxpose.xlu0.b32.cont [11/16] 0.0, 128
        %1402 = vxpose.xlu0.b32.cont [12/16] 0.0, 128
        %1403 = vxpose.xlu0.b32.cont [13/16] 0.0, 128
        %1404 = vxpose.xlu0.b32.cont [14/16] 0.0, 128
        %1405 = vxpose.xlu0.b32.cont [15/16] 0.0, 128
        %1406 = vxpose.xlu0.b32.end [16/16] 0.0, 128
        %v1407 = vpop.trf.xlu0
        %v1408 = vpop.trf.xlu0
        %v1409 = vpop.trf.xlu0
        %v1410 = vpop.trf.xlu0
        %v1411 = vpop.trf.xlu0
        %v1412 = vpop.trf.xlu0
        %v1413 = vpop.trf.xlu0
        %v1414 = vpop.trf.xlu0
        %v1415 = vpop.trf.xlu0
        %v1416 = vpop.trf.xlu0
        %v1417 = vpop.trf.xlu0
        %v1418 = vpop.trf.xlu0
        %v1419 = vpop.trf.xlu0
        %v1420 = vpop.trf.xlu0
        %v1421 = vpop.trf.xlu0
        %v1422 = vpop.trf.xlu0
        %1423 = vxpose.xlu0.b32.start [1/16] %v1024, 128
        %1424 = vxpose.xlu0.b32.cont [2/16] %v1026, 128
        %1425 = vxpose.xlu0.b32.cont [3/16] 0.0, 128
        %1426 = vxpose.xlu0.b32.cont [4/16] 0.0, 128
        %1427 = vxpose.xlu0.b32.cont [5/16] 0.0, 128
        %1428 = vxpose.xlu0.b32.cont [6/16] 0.0, 128
        %1429 = vxpose.xlu0.b32.cont [7/16] 0.0, 128
        %1430 = vxpose.xlu0.b32.cont [8/16] 0.0, 128
        %1431 = vxpose.xlu0.b32.cont [9/16] 0.0, 128
        %1432 = vxpose.xlu0.b32.cont [10/16] 0.0, 128
        %1433 = vxpose.xlu0.b32.cont [11/16] 0.0, 128
        %1434 = vxpose.xlu0.b32.cont [12/16] 0.0, 128
        %1435 = vxpose.xlu0.b32.cont [13/16] 0.0, 128
        %1436 = vxpose.xlu0.b32.cont [14/16] 0.0, 128
        %1437 = vxpose.xlu0.b32.cont [15/16] 0.0, 128
        %1438 = vxpose.xlu0.b32.end [16/16] 0.0, 128
        %v1439 = vpop.trf.xlu0
        %v1440 = vpop.trf.xlu0
        %v1441 = vpop.trf.xlu0
        %v1442 = vpop.trf.xlu0
        %v1443 = vpop.trf.xlu0
        %v1444 = vpop.trf.xlu0
        %v1445 = vpop.trf.xlu0
        %v1446 = vpop.trf.xlu0
        %v1447 = vpop.trf.xlu0
        %v1448 = vpop.trf.xlu0
        %v1449 = vpop.trf.xlu0
        %v1450 = vpop.trf.xlu0
        %v1451 = vpop.trf.xlu0
        %v1452 = vpop.trf.xlu0
        %v1453 = vpop.trf.xlu0
        %v1454 = vpop.trf.xlu0
        %1455 = vxpose.xlu0.b32.start [1/16] %v1030, 128
        %1456 = vxpose.xlu0.b32.cont [2/16] %v1032, 128
        %1457 = vxpose.xlu0.b32.cont [3/16] 0.0, 128
        %1458 = vxpose.xlu0.b32.cont [4/16] 0.0, 128
        %1459 = vxpose.xlu0.b32.cont [5/16] 0.0, 128
        %1460 = vxpose.xlu0.b32.cont [6/16] 0.0, 128
        %1461 = vxpose.xlu0.b32.cont [7/16] 0.0, 128
        %1462 = vxpose.xlu0.b32.cont [8/16] 0.0, 128
        %1463 = vxpose.xlu0.b32.cont [9/16] 0.0, 128
        %1464 = vxpose.xlu0.b32.cont [10/16] 0.0, 128
        %1465 = vxpose.xlu0.b32.cont [11/16] 0.0, 128
        %1466 = vxpose.xlu0.b32.cont [12/16] 0.0, 128
        %1467 = vxpose.xlu0.b32.cont [13/16] 0.0, 128
        %1468 = vxpose.xlu0.b32.cont [14/16] 0.0, 128
        %1469 = vxpose.xlu0.b32.cont [15/16] 0.0, 128
        %1470 = vxpose.xlu0.b32.end [16/16] 0.0, 128
        %v1471 = vpop.trf.xlu0
        %v1472 = vpop.trf.xlu0
        %v1473 = vpop.trf.xlu0
        %v1474 = vpop.trf.xlu0
        %v1475 = vpop.trf.xlu0
        %v1476 = vpop.trf.xlu0
        %v1477 = vpop.trf.xlu0
        %v1478 = vpop.trf.xlu0
        %v1479 = vpop.trf.xlu0
        %v1480 = vpop.trf.xlu0
        %v1481 = vpop.trf.xlu0
        %v1482 = vpop.trf.xlu0
        %v1483 = vpop.trf.xlu0
        %v1484 = vpop.trf.xlu0
        %v1485 = vpop.trf.xlu0
        %v1486 = vpop.trf.xlu0
        %1487 = vxpose.xlu0.b32.start [1/16] %v1036, 128
        %1488 = vxpose.xlu0.b32.cont [2/16] %v1038, 128
        %1489 = vxpose.xlu0.b32.cont [3/16] 0.0, 128
        %1490 = vxpose.xlu0.b32.cont [4/16] 0.0, 128
        %1491 = vxpose.xlu0.b32.cont [5/16] 0.0, 128
        %1492 = vxpose.xlu0.b32.cont [6/16] 0.0, 128
        %1493 = vxpose.xlu0.b32.cont [7/16] 0.0, 128
        %1494 = vxpose.xlu0.b32.cont [8/16] 0.0, 128
        %1495 = vxpose.xlu0.b32.cont [9/16] 0.0, 128
        %1496 = vxpose.xlu0.b32.cont [10/16] 0.0, 128
        %1497 = vxpose.xlu0.b32.cont [11/16] 0.0, 128
        %1498 = vxpose.xlu0.b32.cont [12/16] 0.0, 128
        %1499 = vxpose.xlu0.b32.cont [13/16] 0.0, 128
        %1500 = vxpose.xlu0.b32.cont [14/16] 0.0, 128
        %1501 = vxpose.xlu0.b32.cont [15/16] 0.0, 128
        %1502 = vxpose.xlu0.b32.end [16/16] 0.0, 128
        %v1503 = vpop.trf.xlu0
        %v1504 = vpop.trf.xlu0
        %v1505 = vpop.trf.xlu0
        %v1506 = vpop.trf.xlu0
        %v1507 = vpop.trf.xlu0
        %v1508 = vpop.trf.xlu0
        %v1509 = vpop.trf.xlu0
        %v1510 = vpop.trf.xlu0
        %v1511 = vpop.trf.xlu0
        %v1512 = vpop.trf.xlu0
        %v1513 = vpop.trf.xlu0
        %v1514 = vpop.trf.xlu0
        %v1515 = vpop.trf.xlu0
        %v1516 = vpop.trf.xlu0
        %v1517 = vpop.trf.xlu0
        %v1518 = vpop.trf.xlu0
        %v1520 = vsel %vm1302, %v1407, 0
        %v1523 = vsel %vm1302, %v1383, 0
        %v1526 = vsel %vm1302, %v1384, 0
        %1528 = vmatpush.xpose.msra.mxu0 0.0
        %1529 = vmatpush.xpose.msra.mxu0 0.0
        %1530 = vmatpush.xpose.msra.mxu0 0.0
        %1531 = vmatpush.xpose.msra.mxu0 0.0
        %1532 = vmatpush.xpose.msra.mxu0 0.0
        %1533 = vmatpush.xpose.msra.mxu0 0.0
        %1534 = vmatpush.xpose.msra.mxu0 0.0
        %1535 = vmatpush.xpose.msra.mxu0 0.0
        %1536 = vmatpush.xpose.msra.mxu0 0.0
        %1537 = vmatpush.xpose.msra.mxu0 0.0
        %1538 = vmatpush.xpose.msra.mxu0 0.0
        %1539 = vmatpush.xpose.msra.mxu0 0.0
        %1540 = vmatpush.xpose.msra.mxu0 0.0
        %1541 = vmatpush.xpose.msra.mxu0 0.0
        %1542 = vmatpush.xpose.msra.mxu0 %v1526
        %1543 = vmatpush.xpose.msra.mxu0 %v1523
        %1544 = vmatmul.f32.gmra.mxu0 %v1520
        %v1545 = vpop.f32.mrf.mxu0
        %v1546 = vadd.f32 0.0, %v1545
        %1547 = vdwg.mxu0
        %v1549 = vsel %vm1302, %v1439, 0
        %v1552 = vsel %vm1302, %v1385, 0
        %v1555 = vsel %vm1302, %v1386, 0
        %1557 = vmatpush.xpose.msra.mxu0 0.0
        %1558 = vmatpush.xpose.msra.mxu0 0.0
        %1559 = vmatpush.xpose.msra.mxu0 0.0
        %1560 = vmatpush.xpose.msra.mxu0 0.0
        %1561 = vmatpush.xpose.msra.mxu0 0.0
        %1562 = vmatpush.xpose.msra.mxu0 0.0
        %1563 = vmatpush.xpose.msra.mxu0 0.0
        %1564 = vmatpush.xpose.msra.mxu0 0.0
        %1565 = vmatpush.xpose.msra.mxu0 0.0
        %1566 = vmatpush.xpose.msra.mxu0 0.0
        %1567 = vmatpush.xpose.msra.mxu0 0.0
        %1568 = vmatpush.xpose.msra.mxu0 0.0
        %1569 = vmatpush.xpose.msra.mxu0 0.0
        %1570 = vmatpush.xpose.msra.mxu0 0.0
        %1571 = vmatpush.xpose.msra.mxu0 %v1555
        %1572 = vmatpush.xpose.msra.mxu0 %v1552
        %1573 = vmatmul.f32.gmra.mxu0 %v1549
        %v1574 = vpop.f32.mrf.mxu0
        %v1575 = vadd.f32 0.0, %v1574
        %1576 = vdwg.mxu0
        %v1578 = vsel %vm1302, %v1471, 0
        %v1581 = vsel %vm1302, %v1387, 0
        %v1584 = vsel %vm1302, %v1388, 0
        %1586 = vmatpush.xpose.msra.mxu0 0.0
        %1587 = vmatpush.xpose.msra.mxu0 0.0
        %1588 = vmatpush.xpose.msra.mxu0 0.0
        %1589 = vmatpush.xpose.msra.mxu0 0.0
        %1590 = vmatpush.xpose.msra.mxu0 0.0
        %1591 = vmatpush.xpose.msra.mxu0 0.0
        %1592 = vmatpush.xpose.msra.mxu0 0.0
        %1593 = vmatpush.xpose.msra.mxu0 0.0
        %1594 = vmatpush.xpose.msra.mxu0 0.0
        %1595 = vmatpush.xpose.msra.mxu0 0.0
        %1596 = vmatpush.xpose.msra.mxu0 0.0
        %1597 = vmatpush.xpose.msra.mxu0 0.0
        %1598 = vmatpush.xpose.msra.mxu0 0.0
        %1599 = vmatpush.xpose.msra.mxu0 0.0
        %1600 = vmatpush.xpose.msra.mxu0 %v1584
        %1601 = vmatpush.xpose.msra.mxu0 %v1581
        %1602 = vmatmul.f32.gmra.mxu0 %v1578
        %v1603 = vpop.f32.mrf.mxu0
        %v1604 = vadd.f32 0.0, %v1603
        %1605 = vdwg.mxu0
        %v1607 = vsel %vm1302, %v1503, 0
        %v1610 = vsel %vm1302, %v1389, 0
        %v1613 = vsel %vm1302, %v1390, 0
        %1615 = vmatpush.xpose.msra.mxu0 0.0
        %1616 = vmatpush.xpose.msra.mxu0 0.0
        %1617 = vmatpush.xpose.msra.mxu0 0.0
        %1618 = vmatpush.xpose.msra.mxu0 0.0
        %1619 = vmatpush.xpose.msra.mxu0 0.0
        %1620 = vmatpush.xpose.msra.mxu0 0.0
        %1621 = vmatpush.xpose.msra.mxu0 0.0
        %1622 = vmatpush.xpose.msra.mxu0 0.0
        %1623 = vmatpush.xpose.msra.mxu0 0.0
        %1624 = vmatpush.xpose.msra.mxu0 0.0
        %1625 = vmatpush.xpose.msra.mxu0 0.0
        %1626 = vmatpush.xpose.msra.mxu0 0.0
        %1627 = vmatpush.xpose.msra.mxu0 0.0
        %1628 = vmatpush.xpose.msra.mxu0 0.0
        %1629 = vmatpush.xpose.msra.mxu0 %v1613
        %1630 = vmatpush.xpose.msra.mxu0 %v1610
        %1631 = vmatmul.f32.gmra.mxu0 %v1607
        %v1632 = vpop.f32.mrf.mxu0
        %v1633 = vadd.f32 0.0, %v1632
        %1634 = vdwg.mxu0
        %1635 = vxpose.xlu0.b32.start [1/16] %v1546, 128
        %1636 = vxpose.xlu0.b32.cont [2/16] 0.0, 128
        %1637 = vxpose.xlu0.b32.cont [3/16] 0.0, 128
        %1638 = vxpose.xlu0.b32.cont [4/16] 0.0, 128
        %1639 = vxpose.xlu0.b32.cont [5/16] 0.0, 128
        %1640 = vxpose.xlu0.b32.cont [6/16] 0.0, 128
        %1641 = vxpose.xlu0.b32.cont [7/16] 0.0, 128
        %1642 = vxpose.xlu0.b32.cont [8/16] 0.0, 128
        %1643 = vxpose.xlu0.b32.cont [9/16] 0.0, 128
        %1644 = vxpose.xlu0.b32.cont [10/16] 0.0, 128
        %1645 = vxpose.xlu0.b32.cont [11/16] 0.0, 128
        %1646 = vxpose.xlu0.b32.cont [12/16] 0.0, 128
        %1647 = vxpose.xlu0.b32.cont [13/16] 0.0, 128
        %1648 = vxpose.xlu0.b32.cont [14/16] 0.0, 128
        %1649 = vxpose.xlu0.b32.cont [15/16] 0.0, 128
        %1650 = vxpose.xlu0.b32.end [16/16] 0.0, 128
        %v1651 = vpop.trf.xlu0
        %v1652 = vpop.trf.xlu0
        %v1653 = vpop.trf.xlu0
        %v1654 = vpop.trf.xlu0
        %v1655 = vpop.trf.xlu0
        %v1656 = vpop.trf.xlu0
        %v1657 = vpop.trf.xlu0
        %v1658 = vpop.trf.xlu0
        %v1659 = vpop.trf.xlu0
        %v1660 = vpop.trf.xlu0
        %v1661 = vpop.trf.xlu0
        %v1662 = vpop.trf.xlu0
        %v1663 = vpop.trf.xlu0
        %v1664 = vpop.trf.xlu0
        %v1665 = vpop.trf.xlu0
        %v1666 = vpop.trf.xlu0
        %1667 = vxpose.xlu0.b32.start [1/16] %v1575, 128
        %1668 = vxpose.xlu0.b32.cont [2/16] 0.0, 128
        %1669 = vxpose.xlu0.b32.cont [3/16] 0.0, 128
        %1670 = vxpose.xlu0.b32.cont [4/16] 0.0, 128
        %1671 = vxpose.xlu0.b32.cont [5/16] 0.0, 128
        %1672 = vxpose.xlu0.b32.cont [6/16] 0.0, 128
        %1673 = vxpose.xlu0.b32.cont [7/16] 0.0, 128
        %1674 = vxpose.xlu0.b32.cont [8/16] 0.0, 128
        %1675 = vxpose.xlu0.b32.cont [9/16] 0.0, 128
        %1676 = vxpose.xlu0.b32.cont [10/16] 0.0, 128
        %1677 = vxpose.xlu0.b32.cont [11/16] 0.0, 128
        %1678 = vxpose.xlu0.b32.cont [12/16] 0.0, 128
        %1679 = vxpose.xlu0.b32.cont [13/16] 0.0, 128
        %1680 = vxpose.xlu0.b32.cont [14/16] 0.0, 128
        %1681 = vxpose.xlu0.b32.cont [15/16] 0.0, 128
        %1682 = vxpose.xlu0.b32.end [16/16] 0.0, 128
        %v1683 = vpop.trf.xlu0
        %v1684 = vpop.trf.xlu0
        %v1685 = vpop.trf.xlu0
        %v1686 = vpop.trf.xlu0
        %v1687 = vpop.trf.xlu0
        %v1688 = vpop.trf.xlu0
        %v1689 = vpop.trf.xlu0
        %v1690 = vpop.trf.xlu0
        %v1691 = vpop.trf.xlu0
        %v1692 = vpop.trf.xlu0
        %v1693 = vpop.trf.xlu0
        %v1694 = vpop.trf.xlu0
        %v1695 = vpop.trf.xlu0
        %v1696 = vpop.trf.xlu0
        %v1697 = vpop.trf.xlu0
        %v1698 = vpop.trf.xlu0
        %1699 = vxpose.xlu0.b32.start [1/16] %v1604, 128
        %1700 = vxpose.xlu0.b32.cont [2/16] 0.0, 128
        %1701 = vxpose.xlu0.b32.cont [3/16] 0.0, 128
        %1702 = vxpose.xlu0.b32.cont [4/16] 0.0, 128
        %1703 = vxpose.xlu0.b32.cont [5/16] 0.0, 128
        %1704 = vxpose.xlu0.b32.cont [6/16] 0.0, 128
        %1705 = vxpose.xlu0.b32.cont [7/16] 0.0, 128
        %1706 = vxpose.xlu0.b32.cont [8/16] 0.0, 128
        %1707 = vxpose.xlu0.b32.cont [9/16] 0.0, 128
        %1708 = vxpose.xlu0.b32.cont [10/16] 0.0, 128
        %1709 = vxpose.xlu0.b32.cont [11/16] 0.0, 128
        %1710 = vxpose.xlu0.b32.cont [12/16] 0.0, 128
        %1711 = vxpose.xlu0.b32.cont [13/16] 0.0, 128
        %1712 = vxpose.xlu0.b32.cont [14/16] 0.0, 128
        %1713 = vxpose.xlu0.b32.cont [15/16] 0.0, 128
        %1714 = vxpose.xlu0.b32.end [16/16] 0.0, 128
        %v1715 = vpop.trf.xlu0
        %v1716 = vpop.trf.xlu0
        %v1717 = vpop.trf.xlu0
        %v1718 = vpop.trf.xlu0
        %v1719 = vpop.trf.xlu0
        %v1720 = vpop.trf.xlu0
        %v1721 = vpop.trf.xlu0
        %v1722 = vpop.trf.xlu0
        %v1723 = vpop.trf.xlu0
        %v1724 = vpop.trf.xlu0
        %v1725 = vpop.trf.xlu0
        %v1726 = vpop.trf.xlu0
        %v1727 = vpop.trf.xlu0
        %v1728 = vpop.trf.xlu0
        %v1729 = vpop.trf.xlu0
        %v1730 = vpop.trf.xlu0
        %1731 = vxpose.xlu0.b32.start [1/16] %v1633, 128
        %1732 = vxpose.xlu0.b32.cont [2/16] 0.0, 128
        %1733 = vxpose.xlu0.b32.cont [3/16] 0.0, 128
        %1734 = vxpose.xlu0.b32.cont [4/16] 0.0, 128
        %1735 = vxpose.xlu0.b32.cont [5/16] 0.0, 128
        %1736 = vxpose.xlu0.b32.cont [6/16] 0.0, 128
        %1737 = vxpose.xlu0.b32.cont [7/16] 0.0, 128
        %1738 = vxpose.xlu0.b32.cont [8/16] 0.0, 128
        %1739 = vxpose.xlu0.b32.cont [9/16] 0.0, 128
        %1740 = vxpose.xlu0.b32.cont [10/16] 0.0, 128
        %1741 = vxpose.xlu0.b32.cont [11/16] 0.0, 128
        %1742 = vxpose.xlu0.b32.cont [12/16] 0.0, 128
        %1743 = vxpose.xlu0.b32.cont [13/16] 0.0, 128
        %1744 = vxpose.xlu0.b32.cont [14/16] 0.0, 128
        %1745 = vxpose.xlu0.b32.cont [15/16] 0.0, 128
        %1746 = vxpose.xlu0.b32.end [16/16] 0.0, 128
        %v1747 = vpop.trf.xlu0
        %v1748 = vpop.trf.xlu0
        %v1749 = vpop.trf.xlu0
        %v1750 = vpop.trf.xlu0
        %v1751 = vpop.trf.xlu0
        %v1752 = vpop.trf.xlu0
        %v1753 = vpop.trf.xlu0
        %v1754 = vpop.trf.xlu0
        %v1755 = vpop.trf.xlu0
        %v1756 = vpop.trf.xlu0
        %v1757 = vpop.trf.xlu0
        %v1758 = vpop.trf.xlu0
        %v1759 = vpop.trf.xlu0
        %v1760 = vpop.trf.xlu0
        %v1761 = vpop.trf.xlu0
        %v1762 = vpop.trf.xlu0
        %v1763 = vrot.slane %v1715, 4
        %vm1764 = vcmask 1047556
        %v1765 = vsel %vm1764, %v1763, %v1651
        %v1766 = vrot.slane %v1651, 4
        %v1767 = vsel %vm1764, %v1715, %v1766
        %v1769 = vunpack.c.l.s4 1983009808
        %v1770 = vunpack.c.0.s8 %v1769
        %v1771 = vperm.slane %v1765, %v1770
        %v1773 = vunpack.c.l.s4 1983009808
        %v1774 = vunpack.c.0.s8 %v1773
        %v1775 = vperm.slane %v1767, %v1774
        %v1776 = vrot.slane %v1747, 4
        %v1777 = vsel %vm1764, %v1776, %v1683
        %v1778 = vrot.slane %v1683, 4
        %v1779 = vsel %vm1764, %v1747, %v1778
        %v1781 = vunpack.c.l.s4 1983009808
        %v1782 = vunpack.c.0.s8 %v1781
        %v1783 = vperm.slane %v1777, %v1782
        %v1785 = vunpack.c.l.s4 1983009808
        %v1786 = vunpack.c.0.s8 %v1785
        %v1787 = vperm.slane %v1779, %v1786
        %v1788 = vrot.slane %v1783, 4
        %v1789 = vsel %vm1764, %v1788, %v1771
        %v1790 = vrot.slane %v1771, 4
        %v1791 = vsel %vm1764, %v1783, %v1790
        %v1793 = vunpack.c.l.s4 1934713408
        %v1794 = vunpack.c.0.s8 %v1793
        %v1795 = vperm.slane %v1789, %v1794
        %v1797 = vunpack.c.l.s4 1934713408
        %v1798 = vunpack.c.0.s8 %v1797
        %v1799 = vperm.slane %v1791, %v1798
        %v1800 = vrot.slane %v1787, 4
        %v1801 = vsel %vm1764, %v1800, %v1775
        %v1802 = vrot.slane %v1775, 4
        %v1803 = vsel %vm1764, %v1787, %v1802
        %v1805 = vunpack.c.l.s4 1934713408
        %v1806 = vunpack.c.0.s8 %v1805
        %v1807 = vperm.slane %v1801, %v1806
        %v1809 = vunpack.c.l.s4 1934713408
        %v1810 = vunpack.c.0.s8 %v1809
        %v1811 = vperm.slane %v1803, %v1810
        %v1812 = vrot.slane %v1795, 4
        %v1813 = vsel %vm1764, 0.0, %v1812
        %v1814 = vrot.slane %v1799, 4
        %v1815 = vsel %vm1764, 0.0, %v1814
        %v1816 = vrot.slane %v1807, 4
        %v1817 = vsel %vm1764, 0.0, %v1816
        %v1818 = vrot.slane %v1811, 4
        %v1819 = vsel %vm1764, 0.0, %v1818
        %v1820 = vrot.slane %v1716, 4
        %v1821 = vsel %vm1764, %v1820, %v1652
        %v1822 = vrot.slane %v1652, 4
        %v1823 = vsel %vm1764, %v1716, %v1822
        %v1825 = vunpack.c.l.s4 1983009808
        %v1826 = vunpack.c.0.s8 %v1825
        %v1827 = vperm.slane %v1821, %v1826
        %v1829 = vunpack.c.l.s4 1983009808
        %v1830 = vunpack.c.0.s8 %v1829
        %v1831 = vperm.slane %v1823, %v1830
        %v1832 = vrot.slane %v1748, 4
        %v1833 = vsel %vm1764, %v1832, %v1684
        %v1834 = vrot.slane %v1684, 4
        %v1835 = vsel %vm1764, %v1748, %v1834
        %v1837 = vunpack.c.l.s4 1983009808
        %v1838 = vunpack.c.0.s8 %v1837
        %v1839 = vperm.slane %v1833, %v1838
        %v1841 = vunpack.c.l.s4 1983009808
        %v1842 = vunpack.c.0.s8 %v1841
        %v1843 = vperm.slane %v1835, %v1842
        %v1844 = vrot.slane %v1839, 4
        %v1845 = vsel %vm1764, %v1844, %v1827
        %v1846 = vrot.slane %v1827, 4
        %v1847 = vsel %vm1764, %v1839, %v1846
        %v1849 = vunpack.c.l.s4 1934713408
        %v1850 = vunpack.c.0.s8 %v1849
        %v1851 = vperm.slane %v1845, %v1850
        %v1853 = vunpack.c.l.s4 1934713408
        %v1854 = vunpack.c.0.s8 %v1853
        %v1855 = vperm.slane %v1847, %v1854
        %v1856 = vrot.slane %v1843, 4
        %v1857 = vsel %vm1764, %v1856, %v1831
        %v1858 = vrot.slane %v1831, 4
        %v1859 = vsel %vm1764, %v1843, %v1858
        %v1861 = vunpack.c.l.s4 1934713408
        %v1862 = vunpack.c.0.s8 %v1861
        %v1863 = vperm.slane %v1857, %v1862
        %v1865 = vunpack.c.l.s4 1934713408
        %v1866 = vunpack.c.0.s8 %v1865
        %v1867 = vperm.slane %v1859, %v1866
        %v1868 = vrot.slane %v1851, 4
        %v1869 = vsel %vm1764, 0.0, %v1868
        %v1870 = vrot.slane %v1855, 4
        %v1871 = vsel %vm1764, 0.0, %v1870
        %v1872 = vrot.slane %v1863, 4
        %v1873 = vsel %vm1764, 0.0, %v1872
        %v1874 = vrot.slane %v1867, 4
        %v1875 = vsel %vm1764, 0.0, %v1874
        %v1876 = vsel %vm1764, %v1814, %v1795
        %v1878 = vunpack.c.l.s4 1983009808
        %v1879 = vunpack.c.0.s8 %v1878
        %v1880 = vperm.slane %v1876, %v1879
        %v1881 = vrot.slane %v1815, 4
        %v1882 = vsel %vm1764, %v1881, %v1813
        %v1884 = vunpack.c.l.s4 1983009808
        %v1885 = vunpack.c.0.s8 %v1884
        %v1886 = vperm.slane %v1882, %v1885
        %v1887 = vsel %vm1764, %v1818, %v1807
        %v1889 = vunpack.c.l.s4 1983009808
        %v1890 = vunpack.c.0.s8 %v1889
        %v1891 = vperm.slane %v1887, %v1890
        %v1892 = vrot.slane %v1819, 4
        %v1893 = vsel %vm1764, %v1892, %v1817
        %v1895 = vunpack.c.l.s4 1983009808
        %v1896 = vunpack.c.0.s8 %v1895
        %v1897 = vperm.slane %v1893, %v1896
        %v1898 = vrot.slane %v1886, 4
        %v1899 = vsel %vm1764, %v1898, %v1880
        %v1900 = vrot.slane %v1880, 4
        %v1901 = vsel %vm1764, %v1886, %v1900
        %v1903 = vunpack.c.l.s4 1934713408
        %v1904 = vunpack.c.0.s8 %v1903
        %v1905 = vperm.slane %v1899, %v1904
        %v1907 = vunpack.c.l.s4 1934713408
        %v1908 = vunpack.c.0.s8 %v1907
        %v1909 = vperm.slane %v1901, %v1908
        %v1910 = vrot.slane %v1897, 4
        %v1911 = vsel %vm1764, %v1910, %v1891
        %v1912 = vrot.slane %v1891, 4
        %v1913 = vsel %vm1764, %v1897, %v1912
        %v1915 = vunpack.c.l.s4 1934713408
        %v1916 = vunpack.c.0.s8 %v1915
        %v1917 = vperm.slane %v1911, %v1916
        %v1919 = vunpack.c.l.s4 1934713408
        %v1920 = vunpack.c.0.s8 %v1919
        %v1921 = vperm.slane %v1913, %v1920
        %v1922 = vrot.slane %v1917, 4
        %v1923 = vsel %vm1764, %v1922, %v1905
        %v1924 = vrot.slane %v1905, 4
        %v1925 = vsel %vm1764, %v1917, %v1924
        %v1926 = vrot.slane %v1921, 4
        %v1927 = vsel %vm1764, %v1926, %v1909
        %v1928 = vrot.slane %v1909, 4
        %v1929 = vsel %vm1764, %v1921, %v1928
        %v1930 = vsel %vm1764, %v1870, %v1851
        %v1932 = vunpack.c.l.s4 1983009808
        %v1933 = vunpack.c.0.s8 %v1932
        %v1934 = vperm.slane %v1930, %v1933
        %v1935 = vrot.slane %v1871, 4
        %v1936 = vsel %vm1764, %v1935, %v1869
        %v1938 = vunpack.c.l.s4 1983009808
        %v1939 = vunpack.c.0.s8 %v1938
        %v1940 = vperm.slane %v1936, %v1939
        %v1941 = vsel %vm1764, %v1874, %v1863
        %v1943 = vunpack.c.l.s4 1983009808
        %v1944 = vunpack.c.0.s8 %v1943
        %v1945 = vperm.slane %v1941, %v1944
        %v1946 = vrot.slane %v1875, 4
        %v1947 = vsel %vm1764, %v1946, %v1873
        %v1949 = vunpack.c.l.s4 1983009808
        %v1950 = vunpack.c.0.s8 %v1949
        %v1951 = vperm.slane %v1947, %v1950
        %v1952 = vrot.slane %v1940, 4
        %v1953 = vsel %vm1764, %v1952, %v1934
        %v1954 = vrot.slane %v1934, 4
        %v1955 = vsel %vm1764, %v1940, %v1954
        %v1957 = vunpack.c.l.s4 1934713408
        %v1958 = vunpack.c.0.s8 %v1957
        %v1959 = vperm.slane %v1953, %v1958
        %v1961 = vunpack.c.l.s4 1934713408
        %v1962 = vunpack.c.0.s8 %v1961
        %v1963 = vperm.slane %v1955, %v1962
        %v1964 = vrot.slane %v1951, 4
        %v1965 = vsel %vm1764, %v1964, %v1945
        %v1966 = vrot.slane %v1945, 4
        %v1967 = vsel %vm1764, %v1951, %v1966
        %v1969 = vunpack.c.l.s4 1934713408
        %v1970 = vunpack.c.0.s8 %v1969
        %v1971 = vperm.slane %v1965, %v1970
        %v1973 = vunpack.c.l.s4 1934713408
        %v1974 = vunpack.c.0.s8 %v1973
        %v1975 = vperm.slane %v1967, %v1974
        %v1976 = vrot.slane %v1971, 4
        %v1977 = vsel %vm1764, %v1976, %v1959
        %v1978 = vrot.slane %v1959, 4
        %v1979 = vsel %vm1764, %v1971, %v1978
        %v1980 = vrot.slane %v1975, 4
        %v1981 = vsel %vm1764, %v1980, %v1963
        %v1982 = vrot.slane %v1963, 4
        %v1983 = vsel %vm1764, %v1975, %v1982
        %1986 = vrot.lane.b32.xlu0 %v1925, 8
        %v1987 = vpop.permute.xlu0 %1986
        %1988 = vrot.lane.b32.xlu0 %v1979, 8
        %v1989 = vpop.permute.xlu0 %1988
        %1994 = vrot.lane.b32.xlu0 %v1927, 16
        %v1995 = vpop.permute.xlu0 %1994
        %1996 = vrot.lane.b32.xlu0 %v1981, 16
        %v1997 = vpop.permute.xlu0 %1996
        %2002 = vrot.lane.b32.xlu0 %v1929, 24
        %v2003 = vpop.permute.xlu0 %2002
        %2004 = vrot.lane.b32.xlu0 %v1983, 24
        %v2005 = vpop.permute.xlu0 %2004
        %v2008 = vsel %vm1193, %v1923, %v1987
        %v2009 = vsel %vm1193, %v1977, %v1989
        %v2010 = vsel %vm1302, %v2008, %v1995
        %v2011 = vsel %vm1302, %v2009, %v1997
        %vm2012 = vcmask 195584
        %v2013 = vsel %vm2012, %v2010, %v2003
        %v2014 = vsel %vm2012, %v2011, %v2005
        %v2015 = vld [vmem:[%s880] sm:$0xff]
        %v2016 = vld [vmem:[%s880 + $0x8] sm:$0xff]
        %v2017 = vld [vmem:[%s880 + $0x10] sm:$0xff]
        %v2018 = vld [vmem:[%s880 + $0x18] sm:$0xff]
        %v2019 = vld [vmem:[%s883] sm:$0x1]
        %v2021 = vperm.slane %v2019, 0
        %v2024 = vsel %vm924, %v2013, 0
        %v2027 = vsel %vm924, %v2014, 0
        %2029 = vmatpush.msra.mxu0 0.0
        %2030 = vmatpush.msra.mxu0 0.0
        %2031 = vmatpush.msra.mxu0 0.0
        %2032 = vmatpush.msra.mxu0 0.0
        %2033 = vmatpush.msra.mxu0 0.0
        %2034 = vmatpush.msra.mxu0 0.0
        %2035 = vmatpush.msra.mxu0 0.0
        %2036 = vmatpush.msra.mxu0 0.0
        %2037 = vmatpush.msra.mxu0 0.0
        %2038 = vmatpush.msra.mxu0 0.0
        %2039 = vmatpush.msra.mxu0 0.0
        %2040 = vmatpush.msra.mxu0 0.0
        %2041 = vmatpush.msra.mxu0 %v2018
        %2042 = vmatpush.msra.mxu0 %v2017
        %2043 = vmatpush.msra.mxu0 %v2016
        %2044 = vmatpush.msra.mxu0 %v2015
        %2045 = vmatmul.f32.gmra.mxu0 %v2024
        %v2046 = vpop.f32.mrf.mxu0
        %v2047 = vadd.f32 %v2021, %v2046
        %2048 = vmatmul.f32.gmra.mxu0 %v2027
        %v2049 = vpop.f32.mrf.mxu0
        %v2050 = vadd.f32 %v2021, %v2049
        %2051 = vdwg.mxu0
        %v2052 = vadd.f32 %v910, %v2047
        %v2053 = vadd.f32 %v911, %v2050
        %v2054 = vld [vmem:[%s734] sm:$0x1]
        %v2055 = vld [vmem:[%s886] sm:$0x1]
        %v2056 = vsel %vm924, %v2052, 0.0
        %2057 = vadd.xlane.f32.xlu0 %v2056
        %v2058 = vpop.xlane.xlu0 %2057
        %v2059 = vsel %vm924, %v2053, 0.0
        %2060 = vadd.xlane.f32.xlu0 %v2059
        %v2061 = vpop.xlane.xlu0 %2060
        %v2062 = vrcp.pop 32.0
        %v2063 = vmul.f32 32.0, %v2062
        %v2064 = vsub.f32 1.0, %v2063
        %v2065 = vmul.f32 %v2062, %v2064
        %v2066 = vadd.f32 %v2062, %v2065
        %vm2067 = vweird.f32 %v2062
        %v2068 = vsel %vm2067, %v2062, %v2066
        %v2069 = vmul.f32 %v2058, %v2068
        %v2070 = vmul.f32 %v2061, %v2068
        %v2071 = vsub.f32 %v2052, %v2069
        %v2072 = vsub.f32 %v2053, %v2070
        %v2073 = vmul.f32 %v2071, %v2071
        %v2074 = vmul.f32 %v2072, %v2072
        %v2075 = vsel %vm924, %v2073, 0.0
        %2076 = vadd.xlane.f32.xlu0 %v2075
        %v2077 = vpop.xlane.xlu0 %2076
        %v2078 = vsel %vm924, %v2074, 0.0
        %2079 = vadd.xlane.f32.xlu0 %v2078
        %v2080 = vpop.xlane.xlu0 %2079
        %v2081 = vmul.f32 %v2077, %v2068
        %v2082 = vmul.f32 %v2080, %v2068
        %v2083 = vadd.f32 %v2081, 1e-05
        %v2084 = vadd.f32 %v2082, 1e-05
        %v2085 = vrsqrt.pop %v2083
        %v2086 = vmul.f32 %v2085, %v2083
        %v2087 = vmul.f32 %v2086, %v2085
        %v2088 = vmul.f32 0.5, %v2087
        %v2089 = vsub.f32 1.5, %v2088
        %v2090 = vmul.f32 %v2085, %v2089
        %vm2091 = vweird.f32 %v2083
        %vm2092 = vweird.f32 %v2085
        %vm2093 = vmor %vm2091, %vm2092
        %v2094 = vsel %vm2093, %v2085, %v2090
        %v2095 = vrsqrt.pop %v2084
        %v2096 = vmul.f32 %v2095, %v2084
        %v2097 = vmul.f32 %v2096, %v2095
        %v2098 = vmul.f32 0.5, %v2097
        %v2099 = vsub.f32 1.5, %v2098
        %v2100 = vmul.f32 %v2095, %v2099
        %vm2101 = vweird.f32 %v2084
        %vm2102 = vweird.f32 %v2095
        %vm2103 = vmor %vm2101, %vm2102
        %v2104 = vsel %vm2103, %v2095, %v2100
        %v2105 = vmul.f32 %v2071, %v2094
        %v2106 = vmul.f32 %v2072, %v2104
        %v2108 = vperm.slane %v2054, 0
        %v2110 = vmul.f32 %v2105, %v2108
        %v2111 = vmul.f32 %v2106, %v2108
        %v2113 = vperm.slane %v2055, 0
        %v2115 = vadd.f32 %v2110, %v2113
        %v2116 = vadd.f32 %v2111, %v2113
        %v2117 = vld [vmem:[%s744] sm:$0xff]
        %v2118 = vld [vmem:[%s744 + $0x8] sm:$0xff]
        %v2119 = vld [vmem:[%s744 + $0x10] sm:$0xff]
        %v2120 = vld [vmem:[%s744 + $0x18] sm:$0xff]
        %v2121 = vld [vmem:[%s889] sm:$0x1]
        %v2123 = vperm.slane %v2121, 0
        %v2126 = vsel %vm924, %v2115, 0
        %v2129 = vsel %vm924, %v2116, 0
        %2131 = vmatpush.msra.mxu0 0.0
        %2132 = vmatpush.msra.mxu0 0.0
        %2133 = vmatpush.msra.mxu0 0.0
        %2134 = vmatpush.msra.mxu0 0.0
        %2135 = vmatpush.msra.mxu0 0.0
        %2136 = vmatpush.msra.mxu0 0.0
        %2137 = vmatpush.msra.mxu0 0.0
        %2138 = vmatpush.msra.mxu0 0.0
        %2139 = vmatpush.msra.mxu0 0.0
        %2140 = vmatpush.msra.mxu0 0.0
        %2141 = vmatpush.msra.mxu0 0.0
        %2142 = vmatpush.msra.mxu0 0.0
        %2143 = vmatpush.msra.mxu0 %v2120
        %2144 = vmatpush.msra.mxu0 %v2119
        %2145 = vmatpush.msra.mxu0 %v2118
        %2146 = vmatpush.msra.mxu0 %v2117
        %2147 = vmatmul.f32.gmra.mxu0 %v2126
        %v2148 = vpop.f32.mrf.mxu0
        %v2149 = vadd.f32 %v2123, %v2148
        %2150 = vmatmul.f32.gmra.mxu0 %v2129
        %v2151 = vpop.f32.mrf.mxu0
        %v2152 = vadd.f32 %v2123, %v2151
        %2153 = vdwg.mxu0
        %v2154 = vmax.f32 %v2149, 0.0
        %v2155 = vmax.f32 %v2152, 0.0
        %v2156 = vld [vmem:[%s894] sm:$0xff]
        %v2157 = vld [vmem:[%s894 + $0x8] sm:$0xff]
        %v2158 = vld [vmem:[%s894 + $0x10] sm:$0xff]
        %v2159 = vld [vmem:[%s894 + $0x18] sm:$0xff]
        %v2160 = vld [vmem:[%s894 + $0x20] sm:$0xff]
        %v2161 = vld [vmem:[%s894 + $0x28] sm:$0xff]
        %v2162 = vld [vmem:[%s894 + $0x30] sm:$0xff]
        %v2163 = vld [vmem:[%s894 + $0x38] sm:$0xff]
        %v2164 = vld [vmem:[%s897] sm:$0x1]
        %v2166 = vperm.slane %v2164, 0
        %vm2168 = vcmask 523264
        %v2170 = vsel %vm2168, %v2154, 0
        %v2173 = vsel %vm2168, %v2155, 0
        %2175 = vmatpush.msra.mxu0 0.0
        %2176 = vmatpush.msra.mxu0 0.0
        %2177 = vmatpush.msra.mxu0 0.0
        %2178 = vmatpush.msra.mxu0 0.0
        %2179 = vmatpush.msra.mxu0 0.0
        %2180 = vmatpush.msra.mxu0 0.0
        %2181 = vmatpush.msra.mxu0 0.0
        %2182 = vmatpush.msra.mxu0 0.0
        %2183 = vmatpush.msra.mxu0 %v2163
        %2184 = vmatpush.msra.mxu0 %v2162
        %2185 = vmatpush.msra.mxu0 %v2161
        %2186 = vmatpush.msra.mxu0 %v2160
        %2187 = vmatpush.msra.mxu0 %v2159
        %2188 = vmatpush.msra.mxu0 %v2158
        %2189 = vmatpush.msra.mxu0 %v2157
        %2190 = vmatpush.msra.mxu0 %v2156
        %2191 = vmatmul.f32.gmra.mxu0 %v2170
        %v2192 = vpop.f32.mrf.mxu0
        %v2193 = vadd.f32 %v2166, %v2192
        %2194 = vmatmul.f32.gmra.mxu0 %v2173
        %v2195 = vpop.f32.mrf.mxu0
        %v2196 = vadd.f32 %v2166, %v2195
        %2197 = vdwg.mxu0
        %v2198 = vadd.f32 %v2115, %v2193
        %v2199 = vadd.f32 %v2116, %v2196
        %v2200 = vld [vmem:[%s753] sm:$0x1]
        %v2201 = vld [vmem:[%s900] sm:$0x1]
        %v2202 = vsel %vm924, %v2198, 0.0
        %2203 = vadd.xlane.f32.xlu0 %v2202
        %v2204 = vpop.xlane.xlu0 %2203
        %v2205 = vsel %vm924, %v2199, 0.0
        %2206 = vadd.xlane.f32.xlu0 %v2205
        %v2207 = vpop.xlane.xlu0 %2206
        %v2208 = vmul.f32 %v2204, %v2068
        %v2209 = vmul.f32 %v2207, %v2068
        %v2210 = vsub.f32 %v2198, %v2208
        %v2211 = vsub.f32 %v2199, %v2209
        %v2212 = vmul.f32 %v2210, %v2210
        %v2213 = vmul.f32 %v2211, %v2211
        %v2214 = vsel %vm924, %v2212, 0.0
        %2215 = vadd.xlane.f32.xlu0 %v2214
        %v2216 = vpop.xlane.xlu0 %2215
        %v2217 = vsel %vm924, %v2213, 0.0
        %2218 = vadd.xlane.f32.xlu0 %v2217
        %v2219 = vpop.xlane.xlu0 %2218
        %v2220 = vmul.f32 %v2216, %v2068
        %v2221 = vmul.f32 %v2219, %v2068
        %v2222 = vadd.f32 %v2220, 1e-05
        %v2223 = vadd.f32 %v2221, 1e-05
        %v2224 = vrsqrt.pop %v2222
        %v2225 = vmul.f32 %v2224, %v2222
        %v2226 = vmul.f32 %v2225, %v2224
        %v2227 = vmul.f32 0.5, %v2226
        %v2228 = vsub.f32 1.5, %v2227
        %v2229 = vmul.f32 %v2224, %v2228
        %vm2230 = vweird.f32 %v2222
        %vm2231 = vweird.f32 %v2224
        %vm2232 = vmor %vm2230, %vm2231
        %v2233 = vsel %vm2232, %v2224, %v2229
        %v2234 = vrsqrt.pop %v2223
        %v2235 = vmul.f32 %v2234, %v2223
        %v2236 = vmul.f32 %v2235, %v2234
        %v2237 = vmul.f32 0.5, %v2236
        %v2238 = vsub.f32 1.5, %v2237
        %v2239 = vmul.f32 %v2234, %v2238
        %vm2240 = vweird.f32 %v2223
        %vm2241 = vweird.f32 %v2234
        %vm2242 = vmor %vm2240, %vm2241
        %v2243 = vsel %vm2242, %v2234, %v2239
        %v2244 = vmul.f32 %v2210, %v2233
        %v2245 = vmul.f32 %v2211, %v2243
        %v2247 = vperm.slane %v2200, 0
        %v2249 = vmul.f32 %v2244, %v2247
        %v2250 = vmul.f32 %v2245, %v2247
        %v2252 = vperm.slane %v2201, 0
        %v2254 = vadd.f32 %v2249, %v2252
        %v2255 = vadd.f32 %v2250, %v2252
        %2256 = vst.msk [vmem:[#allocation2] sm:$0xff] %vm924, %v2254
        %2257 = vst.msk [vmem:[#allocation2 + $0x8] sm:$0xff] %vm924, %v2255
        %p2258 = scmp.eq.s32.totalorder %s47, 1
        // Predicated region
        $region113: #{tpu_custom_call.1} parent=83 // pred_check
          %p2259 = pneg %p2258
        $region114: #{tpu_custom_call.1} parent=83 // pred_check_branch
          %2261 = sbr.rel (%p2259) target = $region116
        $region115: #{tpu_custom_call.1} parent=83 // pred_region
          %2262 = vst.msk [vmem:[%s862] sm:$0xff] %vm924, %v2254
          %2263 = vst.msk [vmem:[%s862 + $0x8] sm:$0xff] %vm924, %v2255
        $region116: #{tpu_custom_call.1} parent=83 // pred_fallthru
          _
        %s2264 = sand.u32 %s478, 1
        %s2265 = scalar_lea.sflag [#allocation5], %s2264
        %s2266 = sand.u32 %s478, 1
        %s2267 = smul.addr %s2266, 16
        %s2268 = scalar_lea.vmem [#allocation14], %s2267
        // Predicated region
        $region117: #{tpu_custom_call.1} parent=83 // pred_check
          %p2269 = pneg %p488
        $region118: #{tpu_custom_call.1} parent=83 // pred_check_branch
          %2271 = sbr.rel (%p2269) target = $region120
        $region119: #{tpu_custom_call.1} parent=83 // pred_region
          %2273 = vsyncadd %s2265, 0
          %s2274 = smul.addr %s46, 2
          %s2275 = smul.addr %s2274, 8
          %s2276 = scalar_lea.hbm %s16, %s2275
          %s2277 = sshll.u32 %s2268, 4
          %s2278 = int_to_ptr.vmem [resolvable:$true] %s2277
          %s2279 = sshll.u32 %s2276, 4
          %s2280 = int_to_ptr.hbm [resolvable:$true] %s2279
          %2285 = dma.vmem_to_hbm [thread:$0]  %s2278, 256, %s2280, %s2265, 128, 128, 8
        $region120: #{tpu_custom_call.1} parent=83 // pred_fallthru
          _
      $region84: #{tpu_custom_call.1} parent=5 // pred_fallthru
        _
      %p2286 = scmp.le.s32.totalorder 2, %s37
      // Predicated region
      $region121: #{tpu_custom_call.1} parent=5 // pred_check
        %p2287 = pneg %p2286
      $region122: #{tpu_custom_call.1} parent=5 // pred_check_branch
        %2289 = sbr.rel (%p2287) target = $region124
      $region123: #{tpu_custom_call.1} parent=5 // pred_region
        %s2290 = ssub.s32 %s37, 2
        // Predicated region
        $region125: #{tpu_custom_call.1} parent=123 // pred_check
          %p2291 = pneg %p494
        $region126: #{tpu_custom_call.1} parent=123 // pred_check_branch
          %2293 = sbr.rel (%p2291) target = $region128
        $region127: #{tpu_custom_call.1} parent=123 // pred_region
          %s2294 = sand.u32 %s479, 1
          %s2295 = scalar_lea.sflag [#allocation5], %s2294
          %s2296 = sand.u32 %s479, 1
          %s2297 = smul.addr %s2296, 16
          %s2298 = scalar_lea.vmem [#allocation14], %s2297
          %2300 = dma.done %s2295, 256
        $region128: #{tpu_custom_call.1} parent=123 // pred_fallthru
          _
      $region124: #{tpu_custom_call.1} parent=5 // pred_fallthru
        _
    $region6: #{tpu_custom_call.1} parent=1 // loop_footer
      %s41 = sadd.s32 1, %s37
    $region7: #{tpu_custom_call.1} parent=1 // loop_footer_branch
      %36 = sbr.rel target = $region3
    $region8: #{tpu_custom_call.1} parent=1 // loop_exit
      _
    %2301 = vsyncpa [#allocation4], 1
    %s2302 = scalar_lea.sflag [#allocation4], 1
    %2303 = vsyncpa %s2302, 1
    %2304 = vsyncpa [#allocation7], 1
    %s2305 = scalar_lea.sflag [#allocation7], 1
    %2306 = vsyncpa %s2305, 1
    %2307 = vsyncpa [#allocation10], 1
    %s2308 = scalar_lea.sflag [#allocation10], 1
    %2309 = vsyncpa %s2308, 1
    %2310 = vsyncpa [#allocation13], 1
    %s2311 = scalar_lea.sflag [#allocation13], 1
    %2312 = vsyncpa %s2311, 1
    %2313 = vsyncpa [#allocation5], 1
    %s2314 = scalar_lea.sflag [#allocation5], 1
    %2315 = vsyncpa %s2314, 1

</llo_original>
